<compile_context>
chip_gen: v7x
topology: tpu7x:2x2x1
jax: 0.10.0
libtpu: 0.0.40
codegen_flags: <defaults>
</compile_context>

<pallas_src>
import functools
import math

import jax
import jax.numpy as jnp
from jax.experimental import pallas as pl
from jax.experimental.pallas import tpu as pltpu


_INV_SQRT2 = 1.0 / math.sqrt(2.0)


def _round_up(v, mult):
    return ((v + mult - 1) // mult) * mult


def _gelu(h, approximate):
    if approximate:
        # tanh formulation -> EUP (its own VLIW slot, overlaps with VPU/MXU).
        return jax.nn.gelu(h, approximate=True)
    # torch.nn.GELU default: 0.5 * x * (1 + erf(x / sqrt(2))), computed in f32.
    return 0.5 * h * (1.0 + jax.lax.erf(h * jnp.float32(_INV_SQRT2)))


def _policy_kernel(x_ref, w1_ref, b1_ref, w2_ref, b2_ref, w3_ref, b3_ref, o_ref,
                   *, approx_gelu):
    """Fused Linear->GELU->Linear->GELU->Linear on one row tile."""
    x = x_ref[...]

    # Layer 1 (MXU) + bias + GELU; f32 accumulation, f32 bias, f32 GELU.
    h = jnp.dot(x, w1_ref[...], preferred_element_type=jnp.float32) + b1_ref[...]
    h = _gelu(h, approx_gelu)

    # Layer 2 (MXU) + bias + GELU.
    h = jnp.dot(h.astype(w2_ref.dtype), w2_ref[...],
                preferred_element_type=jnp.float32) + b2_ref[...]
    h = _gelu(h, approx_gelu)

    # Head (MXU) + bias; output tile is 128-lane padded -> unmasked store.
    y = jnp.dot(h.astype(w3_ref.dtype), w3_ref[...],
                preferred_element_type=jnp.float32) + b3_ref[...]
    o_ref[...] = y.astype(o_ref.dtype)


def discrete_policy_forward(x, w1, b1, w2, b2, w3, b3, *,
                            out_sizes=None,
                            row_tile=4096,
                            use_bf16=False,
                            approx_gelu=False,
                            single_buffer_weights=True):
    """Compute logits = head(shared(x)).

    x: [..., in_features]; weights stored [in, out] (== torch weight.T).
    If `out_sizes` is a list, w3/b3 are the branch heads concatenated along the
    out dim and the result is split back into per-branch logits (multi-discrete).
    """
    lead_shape = x.shape[:-1]
    d_in = x.shape[-1]
    hidden = w1.shape[1]
    d_out = w3.shape[1]

    compute_dtype = jnp.bfloat16 if use_bf16 else x.dtype
    out_dtype = compute_dtype

    # Flatten leading dims -> [rows, features] (free reshape: contiguous view).
    x2 = x.reshape(-1, d_in).astype(compute_dtype)
    m = x2.shape[0]

    # Lane-dense head: pad out dim to a multiple of 128 (unmasked vst).
    d_out_pad = _round_up(d_out, 128)
    pad_n = d_out_pad - d_out
    w3p = jnp.pad(w3, ((0, 0), (0, pad_n))) if pad_n else w3
    b3p = jnp.pad(b3, (0, pad_n)) if pad_n else b3

    w1c = w1.astype(compute_dtype)
    w2c = w2.astype(compute_dtype)
    w3c = w3p.astype(compute_dtype)
    # Biases stay f32: added onto the f32 accumulator, negligible traffic.
    b1r = b1.reshape(1, hidden).astype(jnp.float32)
    b2r = b2.reshape(1, hidden).astype(jnp.float32)
    b3r = b3p.reshape(1, d_out_pad).astype(jnp.float32)

    # Row tile: large enough to amortize ~0.35us/step grid overhead, but with
    # at least 2 grid steps (when m > 8) so v7x's two TensorCores both get
    # work on the "parallel" row axis.
    row_tile = max(8, int(row_tile))
    n_steps = max(2, pl.cdiv(m, row_tile))
    rt = pl.cdiv(m, n_steps)
    rt = _round_up(rt, 256 if rt >= 256 else 8)
    grid = (pl.cdiv(m, rt),)   # ragged last block handled by Pallas masking.

    # Explicit VMEM budget with headroom (v7x has 64 MiB physical per TC).
    isz = jnp.dtype(compute_dtype).itemsize
    est = (2 * (d_in * hidden + hidden * hidden + hidden * d_out_pad) * isz  # weights
           + 2 * (2 * hidden + d_out_pad) * 4                                # biases
           + 2 * rt * d_in * isz + 2 * rt * d_out_pad * isz                  # x/out dbl-buf
           + 4 * rt * max(hidden, d_out_pad) * 4)                            # f32 activations
    vmem_limit = int(min(max(2 * est, 8 << 20), 48 << 20))

    kernel = functools.partial(_policy_kernel, approx_gelu=approx_gelu)

    def build(single_buffer):
        def w_spec(shape):
            # Constant index_map => weights are DMA'd once; single-buffering
            # them saves VMEM (important if hidden_size grows, esp. on v7x).
            if single_buffer:
                return pl.BlockSpec(shape, lambda i: (0, 0),
                                    pipeline_mode=pl.Buffered(1))
            return pl.BlockSpec(shape, lambda i: (0, 0))

        return pl.pallas_call(
            kernel,
            out_shape=jax.ShapeDtypeStruct((m, d_out_pad), out_dtype),
            grid_spec=pltpu.PrefetchScalarGridSpec(
                num_scalar_prefetch=0,
                grid=grid,
                in_specs=[
                    pl.BlockSpec((rt, d_in), lambda i: (i, 0)),   # x row tile
                    w_spec((d_in, hidden)),                       # W1 (resident)
                    w_spec((1, hidden)),                          # b1
                    w_spec((hidden, hidden)),                     # W2 (resident)
                    w_spec((1, hidden)),                          # b2
                    w_spec((hidden, d_out_pad)),                  # W3 (resident, lane-padded)
                    w_spec((1, d_out_pad)),                       # b3
                ],
                out_specs=pl.BlockSpec((rt, d_out_pad), lambda i: (i, 0)),
            ),
            compiler_params=pltpu.CompilerParams(
                dimension_semantics=("parallel",),
                vmem_limit_bytes=vmem_limit),
        )

    args = (x2, w1c, b1r, w2c, b2r, w3c, b3r)
    if single_buffer_weights:
        try:
            out_p = build(True)(*args)
        except Exception:
            # Graceful fallback if Buffered(1) is rejected by this jax build.
            out_p = build(False)(*args)
    else:
        out_p = build(False)(*args)

    out_p = out_p.reshape(lead_shape + (d_out_pad,))

    if out_sizes is None:
        return out_p[..., :d_out]
    # Multi-discrete: branch heads == slices of the concatenated head output.
    # (Consumers that can take the concatenated logits should prefer
    #  out_sizes=None and split lazily to avoid extra HBM passes.)
    branches, off = [], 0
    for sz in out_sizes:
        branches.append(out_p[..., off:off + sz])
        off += sz
    return branches


def init_params(key, in_features, hidden_size, out_features, dtype=jnp.float32):
    """Deterministic synthetic params (shapes follow the torch module)."""
    k1, k2, k3, k4, k5, k6 = jax.random.split(key, 6)
    # Stored as [in, out] so the kernel does x @ W (== torch x @ weight.T).
    w1 = jax.random.normal(k1, (in_features, hidden_size), dtype) / math.sqrt(in_features)
    b1 = jax.random.normal(k2, (hidden_size,), dtype) * 0.01
    w2 = jax.random.normal(k3, (hidden_size, hidden_size), dtype) / math.sqrt(hidden_size)
    b2 = jax.random.normal(k4, (hidden_size,), dtype) * 0.01
    w3 = jax.random.normal(k5, (hidden_size, out_features), dtype) / math.sqrt(hidden_size)
    b3 = jax.random.normal(k6, (out_features,), dtype) * 0.01
    return w1, b1, w2, b2, w3, b3


def _reference(x, w1, b1, w2, b2, w3, b3):
    """Pure-JAX reference (exact erf GELU, f32) for correctness checking."""
    h = x @ w1 + b1
    h = 0.5 * h * (1.0 + jax.lax.erf(h / jnp.sqrt(2.0)))
    h = h @ w2 + b2
    h = 0.5 * h * (1.0 + jax.lax.erf(h / jnp.sqrt(2.0)))
    return h @ w3 + b3


if __name__ == "__main__":
    # Small shapes consistent with the module: emb = (batch, seq, in_features).
    in_features, hidden_size, out_features = 16, 32, 6
    batch, seq = 2, 8

    key = jax.random.PRNGKey(0)
    k_emb, k_par = jax.random.split(key, 2)

    emb = jax.random.normal(k_emb, (batch, seq, in_features), jnp.float32)
    w1, b1, w2, b2, w3, b3 = init_params(k_par, in_features, hidden_size,
                                         out_features)

    ref = _reference(emb, w1, b1, w2, b2, w3, b3)

    # 1) Single discrete head, exact-erf f32 path (matches torch numerics).
    logits = discrete_policy_forward(emb, w1, b1, w2, b2, w3, b3)
    logits = jax.block_until_ready(logits)
    assert logits.shape == (batch, seq, out_features)
    assert jnp.allclose(logits, ref, atol=1e-5, rtol=1e-5), "mismatch vs reference"

    # 2) Multi-discrete heads: branch heads == slices of a concatenated head.
    branch_logits = discrete_policy_forward(emb, w1, b1, w2, b2, w3, b3,
                                            out_sizes=[2, 4])
    branch_logits = jax.block_until_ready(branch_logits)
    assert branch_logits[0].shape == (batch, seq, 2)
    assert branch_logits[1].shape == (batch, seq, 4)
    assert jnp.allclose(jnp.concatenate(branch_logits, axis=-1), ref,
                        atol=1e-5, rtol=1e-5)

    # 3) Fast path: bf16 I/O + tanh-approx GELU (EUP), f32 accumulation.
    fast = discrete_policy_forward(emb, w1, b1, w2, b2, w3, b3,
                                   use_bf16=True, approx_gelu=True)
    fast = jax.block_until_ready(fast)
    assert fast.dtype == jnp.bfloat16
    assert jnp.allclose(fast.astype(jnp.float32), ref, atol=1e-1, rtol=1e-1)

    # TODO(synk): Categorical sampling / log_prob / entropy (get_actions,
    # recompute_log_probs) are distribution ops outside the forward pass and
    # are left to plain JAX on the logits.

    print("KERNEL_OK")
</pallas_src>

<mosaic_0001>
module attributes {stable_mosaic.version = 11 : i64} {
  func.func @_policy_kernel(%arg0: i32, %arg1: memref<8x16xf32, #tpu.memory_space<vmem>>, %arg2: memref<16x32xf32, #tpu.memory_space<vmem>>, %arg3: memref<1x32xf32, #tpu.memory_space<vmem>>, %arg4: memref<32x32xf32, #tpu.memory_space<vmem>>, %arg5: memref<1x32xf32, #tpu.memory_space<vmem>>, %arg6: memref<32x128xf32, #tpu.memory_space<vmem>>, %arg7: memref<1x128xf32, #tpu.memory_space<vmem>>, %arg8: memref<8x128xf32, #tpu.memory_space<vmem>>) attributes {dimension_semantics = [#tpu.dimension_semantics<parallel>], iteration_bounds = array<i64: 2>, scalar_prefetch = 0 : i64, scratch_operands = 0 : i64, tpu.core_type = #tpu.core_type<tc>, window_params = [{transform_indices = @transform_0, window_bounds = array<i64: 8, 16>}, {pipeline_mode = #tpu.pipeline_mode<synchronous>, transform_indices = @transform_1, window_bounds = array<i64: 16, 32>}, {pipeline_mode = #tpu.pipeline_mode<synchronous>, transform_indices = @transform_2, window_bounds = array<i64: 1, 32>}, {pipeline_mode = #tpu.pipeline_mode<synchronous>, transform_indices = @transform_3, window_bounds = array<i64: 32, 32>}, {pipeline_mode = #tpu.pipeline_mode<synchronous>, transform_indices = @transform_4, window_bounds = array<i64: 1, 32>}, {pipeline_mode = #tpu.pipeline_mode<synchronous>, transform_indices = @transform_5, window_bounds = array<i64: 32, 128>}, {pipeline_mode = #tpu.pipeline_mode<synchronous>, transform_indices = @transform_6, window_bounds = array<i64: 1, 128>}, {transform_indices = @transform_7, window_bounds = array<i64: 8, 128>}]} {
    %c0 = arith.constant 0 : index
    %c0_0 = arith.constant 0 : index
    %0 = vector.load %arg1[%c0, %c0_0] : memref<8x16xf32, #tpu.memory_space<vmem>>, vector<8x16xf32>
    %c0_1 = arith.constant 0 : index
    %c0_2 = arith.constant 0 : index
    %1 = vector.load %arg2[%c0_1, %c0_2] : memref<16x32xf32, #tpu.memory_space<vmem>>, vector<16x32xf32>
    %cst = arith.constant dense<0.000000e+00> : vector<8x32xf32>
    %2 = tpu.matmul %0, %1, %cst {dimension_numbers = #tpu.dot_dimension_numbers<[1], [0], [0], [1], [0, 0, 1, 1], [], []>} : vector<8x16xf32>, vector<16x32xf32>, vector<8x32xf32> -> vector<8x32xf32>
    %c0_3 = arith.constant 0 : index
    %c0_4 = arith.constant 0 : index
    %3 = vector.load %arg3[%c0_3, %c0_4] : memref<1x32xf32, #tpu.memory_space<vmem>>, vector<1x32xf32>
    %4 = vector.broadcast %3 : vector<1x32xf32> to vector<8x32xf32>
    %5 = arith.addf %2, %4 : vector<8x32xf32>
    %cst_5 = arith.constant 5.000000e-01 : f32
    %6 = vector.broadcast %cst_5 : f32 to vector<8x32xf32>
    %7 = arith.mulf %6, %5 : vector<8x32xf32>
    %cst_6 = arith.constant 0.707106769 : f32
    %8 = vector.broadcast %cst_6 : f32 to vector<8x32xf32>
    %9 = arith.mulf %5, %8 : vector<8x32xf32>
    %10 = math.erf %9 : vector<8x32xf32>
    %cst_7 = arith.constant 1.000000e+00 : f32
    %11 = vector.broadcast %cst_7 : f32 to vector<8x32xf32>
    %12 = arith.addf %11, %10 : vector<8x32xf32>
    %13 = arith.mulf %7, %12 : vector<8x32xf32>
    %c0_8 = arith.constant 0 : index
    %c0_9 = arith.constant 0 : index
    %14 = vector.load %arg4[%c0_8, %c0_9] : memref<32x32xf32, #tpu.memory_space<vmem>>, vector<32x32xf32>
    %cst_10 = arith.constant dense<0.000000e+00> : vector<8x32xf32>
    %15 = tpu.matmul %13, %14, %cst_10 {dimension_numbers = #tpu.dot_dimension_numbers<[1], [0], [0], [1], [0, 0, 1, 1], [], []>} : vector<8x32xf32>, vector<32x32xf32>, vector<8x32xf32> -> vector<8x32xf32>
    %c0_11 = arith.constant 0 : index
    %c0_12 = arith.constant 0 : index
    %16 = vector.load %arg5[%c0_11, %c0_12] : memref<1x32xf32, #tpu.memory_space<vmem>>, vector<1x32xf32>
    %17 = vector.broadcast %16 : vector<1x32xf32> to vector<8x32xf32>
    %18 = arith.addf %15, %17 : vector<8x32xf32>
    %cst_13 = arith.constant 5.000000e-01 : f32
    %19 = vector.broadcast %cst_13 : f32 to vector<8x32xf32>
    %20 = arith.mulf %19, %18 : vector<8x32xf32>
    %cst_14 = arith.constant 0.707106769 : f32
    %21 = vector.broadcast %cst_14 : f32 to vector<8x32xf32>
    %22 = arith.mulf %18, %21 : vector<8x32xf32>
    %23 = math.erf %22 : vector<8x32xf32>
    %cst_15 = arith.constant 1.000000e+00 : f32
    %24 = vector.broadcast %cst_15 : f32 to vector<8x32xf32>
    %25 = arith.addf %24, %23 : vector<8x32xf32>
    %26 = arith.mulf %20, %25 : vector<8x32xf32>
    %c0_16 = arith.constant 0 : index
    %c0_17 = arith.constant 0 : index
    %27 = vector.load %arg6[%c0_16, %c0_17] : memref<32x128xf32, #tpu.memory_space<vmem>>, vector<32x128xf32>
    %cst_18 = arith.constant dense<0.000000e+00> : vector<8x128xf32>
    %28 = tpu.matmul %26, %27, %cst_18 {dimension_numbers = #tpu.dot_dimension_numbers<[1], [0], [0], [1], [0, 0, 1, 1], [], []>} : vector<8x32xf32>, vector<32x128xf32>, vector<8x128xf32> -> vector<8x128xf32>
    %c0_19 = arith.constant 0 : index
    %c0_20 = arith.constant 0 : index
    %29 = vector.load %arg7[%c0_19, %c0_20] : memref<1x128xf32, #tpu.memory_space<vmem>>, vector<1x128xf32>
    %30 = vector.broadcast %29 : vector<1x128xf32> to vector<8x128xf32>
    %31 = arith.addf %28, %30 : vector<8x128xf32>
    %c0_21 = arith.constant 0 : index
    %c0_22 = arith.constant 0 : index
    %32 = vector.load %arg8[%c0_21, %c0_22] : memref<8x128xf32, #tpu.memory_space<vmem>>, vector<8x128xf32>
    tpu.vector_store %arg8[%c0_21, %c0_22], %31 {strides = array<i32>} : memref<8x128xf32, #tpu.memory_space<vmem>>, vector<8x128xf32>,
    return
  }
  func.func @transform_0(%arg0: i32) -> (i32, i32) {
    %c0_i32 = arith.constant 0 : i32
    %c0_i32_0 = arith.constant 0 : i32
    return %arg0, %c0_i32 : i32, i32
  }
  func.func @transform_1(%arg0: i32) -> (i32, i32) {
    %c0_i32 = arith.constant 0 : i32
    %c0_i32_0 = arith.constant 0 : i32
    %c0_i32_1 = arith.constant 0 : i32
    return %c0_i32, %c0_i32_0 : i32, i32
  }
  func.func @transform_2(%arg0: i32) -> (i32, i32) {
    %c0_i32 = arith.constant 0 : i32
    %c0_i32_0 = arith.constant 0 : i32
    %c0_i32_1 = arith.constant 0 : i32
    return %c0_i32, %c0_i32_0 : i32, i32
  }
  func.func @transform_3(%arg0: i32) -> (i32, i32) {
    %c0_i32 = arith.constant 0 : i32
    %c0_i32_0 = arith.constant 0 : i32
    %c0_i32_1 = arith.constant 0 : i32
    return %c0_i32, %c0_i32_0 : i32, i32
  }
  func.func @transform_4(%arg0: i32) -> (i32, i32) {
    %c0_i32 = arith.constant 0 : i32
    %c0_i32_0 = arith.constant 0 : i32
    %c0_i32_1 = arith.constant 0 : i32
    return %c0_i32, %c0_i32_0 : i32, i32
  }
  func.func @transform_5(%arg0: i32) -> (i32, i32) {
    %c0_i32 = arith.constant 0 : i32
    %c0_i32_0 = arith.constant 0 : i32
    %c0_i32_1 = arith.constant 0 : i32
    return %c0_i32, %c0_i32_0 : i32, i32
  }
  func.func @transform_6(%arg0: i32) -> (i32, i32) {
    %c0_i32 = arith.constant 0 : i32
    %c0_i32_0 = arith.constant 0 : i32
    %c0_i32_1 = arith.constant 0 : i32
    return %c0_i32, %c0_i32_0 : i32, i32
  }
  func.func @transform_7(%arg0: i32) -> (i32, i32) {
    %c0_i32 = arith.constant 0 : i32
    %c0_i32_0 = arith.constant 0 : i32
    return %arg0, %c0_i32 : i32, i32
  }
}

module attributes {stable_mosaic.version = 11 : i64} {
  func.func @_policy_kernel(%arg0: i32, %arg1: memref<8x16xf32, #tpu.memory_space<vmem>>, %arg2: memref<16x32xf32, #tpu.memory_space<vmem>>, %arg3: memref<1x32xf32, #tpu.memory_space<vmem>>, %arg4: memref<32x32xf32, #tpu.memory_space<vmem>>, %arg5: memref<1x32xf32, #tpu.memory_space<vmem>>, %arg6: memref<32x128xf32, #tpu.memory_space<vmem>>, %arg7: memref<1x128xf32, #tpu.memory_space<vmem>>, %arg8: memref<8x128xf32, #tpu.memory_space<vmem>>) attributes {dimension_semantics = [#tpu.dimension_semantics<parallel>], iteration_bounds = array<i64: 2>, scalar_prefetch = 0 : i64, scratch_operands = 0 : i64, tpu.core_type = #tpu.core_type<tc>, window_params = [{transform_indices = @transform_0, window_bounds = array<i64: 8, 16>}, {pipeline_mode = #tpu.pipeline_mode<synchronous>, transform_indices = @transform_1, window_bounds = array<i64: 16, 32>}, {pipeline_mode = #tpu.pipeline_mode<synchronous>, transform_indices = @transform_2, window_bounds = array<i64: 1, 32>}, {pipeline_mode = #tpu.pipeline_mode<synchronous>, transform_indices = @transform_3, window_bounds = array<i64: 32, 32>}, {pipeline_mode = #tpu.pipeline_mode<synchronous>, transform_indices = @transform_4, window_bounds = array<i64: 1, 32>}, {pipeline_mode = #tpu.pipeline_mode<synchronous>, transform_indices = @transform_5, window_bounds = array<i64: 32, 128>}, {pipeline_mode = #tpu.pipeline_mode<synchronous>, transform_indices = @transform_6, window_bounds = array<i64: 1, 128>}, {transform_indices = @transform_7, window_bounds = array<i64: 8, 128>}]} {
    %c0 = arith.constant 0 : index
    %c0_0 = arith.constant 0 : index
    %0 = vector.load %arg1[%c0, %c0_0] : memref<8x16xf32, #tpu.memory_space<vmem>>, vector<8x16xf32>
    %c0_1 = arith.constant 0 : index
    %c0_2 = arith.constant 0 : index
    %1 = vector.load %arg2[%c0_1, %c0_2] : memref<16x32xf32, #tpu.memory_space<vmem>>, vector<16x32xf32>
    %cst = arith.constant dense<0.000000e+00> : vector<8x32xf32>
    %2 = tpu.matmul %0, %1, %cst {dimension_numbers = #tpu.dot_dimension_numbers<[1], [0], [0], [1], [0, 0, 1, 1], [], []>} : vector<8x16xf32>, vector<16x32xf32>, vector<8x32xf32> -> vector<8x32xf32>
    %c0_3 = arith.constant 0 : index
    %c0_4 = arith.constant 0 : index
    %3 = vector.load %arg3[%c0_3, %c0_4] : memref<1x32xf32, #tpu.memory_space<vmem>>, vector<1x32xf32>
    %4 = vector.broadcast %3 : vector<1x32xf32> to vector<8x32xf32>
    %5 = arith.addf %2, %4 : vector<8x32xf32>
    %cst_5 = arith.constant 5.000000e-01 : f32
    %6 = vector.broadcast %cst_5 : f32 to vector<8x32xf32>
    %7 = arith.mulf %6, %5 : vector<8x32xf32>
    %cst_6 = arith.constant 0.707106769 : f32
    %8 = vector.broadcast %cst_6 : f32 to vector<8x32xf32>
    %9 = arith.mulf %5, %8 : vector<8x32xf32>
    %10 = math.erf %9 : vector<8x32xf32>
    %cst_7 = arith.constant 1.000000e+00 : f32
    %11 = vector.broadcast %cst_7 : f32 to vector<8x32xf32>
    %12 = arith.addf %11, %10 : vector<8x32xf32>
    %13 = arith.mulf %7, %12 : vector<8x32xf32>
    %c0_8 = arith.constant 0 : index
    %c0_9 = arith.constant 0 : index
    %14 = vector.load %arg4[%c0_8, %c0_9] : memref<32x32xf32, #tpu.memory_space<vmem>>, vector<32x32xf32>
    %cst_10 = arith.constant dense<0.000000e+00> : vector<8x32xf32>
    %15 = tpu.matmul %13, %14, %cst_10 {dimension_numbers = #tpu.dot_dimension_numbers<[1], [0], [0], [1], [0, 0, 1, 1], [], []>} : vector<8x32xf32>, vector<32x32xf32>, vector<8x32xf32> -> vector<8x32xf32>
    %c0_11 = arith.constant 0 : index
    %c0_12 = arith.constant 0 : index
    %16 = vector.load %arg5[%c0_11, %c0_12] : memref<1x32xf32, #tpu.memory_space<vmem>>, vector<1x32xf32>
    %17 = vector.broadcast %16 : vector<1x32xf32> to vector<8x32xf32>
    %18 = arith.addf %15, %17 : vector<8x32xf32>
    %cst_13 = arith.constant 5.000000e-01 : f32
    %19 = vector.broadcast %cst_13 : f32 to vector<8x32xf32>
    %20 = arith.mulf %19, %18 : vector<8x32xf32>
    %cst_14 = arith.constant 0.707106769 : f32
    %21 = vector.broadcast %cst_14 : f32 to vector<8x32xf32>
    %22 = arith.mulf %18, %21 : vector<8x32xf32>
    %23 = math.erf %22 : vector<8x32xf32>
    %cst_15 = arith.constant 1.000000e+00 : f32
    %24 = vector.broadcast %cst_15 : f32 to vector<8x32xf32>
    %25 = arith.addf %24, %23 : vector<8x32xf32>
    %26 = arith.mulf %20, %25 : vector<8x32xf32>
    %c0_16 = arith.constant 0 : index
    %c0_17 = arith.constant 0 : index
    %27 = vector.load %arg6[%c0_16, %c0_17] : memref<32x128xf32, #tpu.memory_space<vmem>>, vector<32x128xf32>
    %cst_18 = arith.constant dense<0.000000e+00> : vector<8x128xf32>
    %28 = tpu.matmul %26, %27, %cst_18 {dimension_numbers = #tpu.dot_dimension_numbers<[1], [0], [0], [1], [0, 0, 1, 1], [], []>} : vector<8x32xf32>, vector<32x128xf32>, vector<8x128xf32> -> vector<8x128xf32>
    %c0_19 = arith.constant 0 : index
    %c0_20 = arith.constant 0 : index
    %29 = vector.load %arg7[%c0_19, %c0_20] : memref<1x128xf32, #tpu.memory_space<vmem>>, vector<1x128xf32>
    %30 = vector.broadcast %29 : vector<1x128xf32> to vector<8x128xf32>
    %31 = arith.addf %28, %30 : vector<8x128xf32>
    %c0_21 = arith.constant 0 : index
    %c0_22 = arith.constant 0 : index
    %32 = vector.load %arg8[%c0_21, %c0_22] : memref<8x128xf32, #tpu.memory_space<vmem>>, vector<8x128xf32>
    tpu.vector_store %arg8[%c0_21, %c0_22], %31 {strides = array<i32>} : memref<8x128xf32, #tpu.memory_space<vmem>>, vector<8x128xf32>,
    return
  }
  func.func @transform_0(%arg0: i32) -> (i32, i32) {
    %c0_i32 = arith.constant 0 : i32
    %c0_i32_0 = arith.constant 0 : i32
    return %arg0, %c0_i32 : i32, i32
  }
  func.func @transform_1(%arg0: i32) -> (i32, i32) {
    %c0_i32 = arith.constant 0 : i32
    %c0_i32_0 = arith.constant 0 : i32
    %c0_i32_1 = arith.constant 0 : i32
    return %c0_i32, %c0_i32_0 : i32, i32
  }
  func.func @transform_2(%arg0: i32) -> (i32, i32) {
    %c0_i32 = arith.constant 0 : i32
    %c0_i32_0 = arith.constant 0 : i32
    %c0_i32_1 = arith.constant 0 : i32
    return %c0_i32, %c0_i32_0 : i32, i32
  }
  func.func @transform_3(%arg0: i32) -> (i32, i32) {
    %c0_i32 = arith.constant 0 : i32
    %c0_i32_0 = arith.constant 0 : i32
    %c0_i32_1 = arith.constant 0 : i32
    return %c0_i32, %c0_i32_0 : i32, i32
  }
  func.func @transform_4(%arg0: i32) -> (i32, i32) {
    %c0_i32 = arith.constant 0 : i32
    %c0_i32_0 = arith.constant 0 : i32
    %c0_i32_1 = arith.constant 0 : i32
    return %c0_i32, %c0_i32_0 : i32, i32
  }
  func.func @transform_5(%arg0: i32) -> (i32, i32) {
    %c0_i32 = arith.constant 0 : i32
    %c0_i32_0 = arith.constant 0 : i32
    %c0_i32_1 = arith.constant 0 : i32
    return %c0_i32, %c0_i32_0 : i32, i32
  }
  func.func @transform_6(%arg0: i32) -> (i32, i32) {
    %c0_i32 = arith.constant 0 : i32
    %c0_i32_0 = arith.constant 0 : i32
    %c0_i32_1 = arith.constant 0 : i32
    return %c0_i32, %c0_i32_0 : i32, i32
  }
  func.func @transform_7(%arg0: i32) -> (i32, i32) {
    %c0_i32 = arith.constant 0 : i32
    %c0_i32_0 = arith.constant 0 : i32
    return %arg0, %c0_i32 : i32, i32
  }
}

</mosaic_0001>

<llo_original>
// kernel: tpu_custom_call.1
$region0: #{tpu_custom_call.1}
  #allocation0 [shape = 'u32[]', space=smem, size = 0x4, offset = 0x4, fixed_abs, tag = 'smem constant byte address 0x4 - core index']
  #allocation1 [shape = 'u32[144,128]{1,0:T(1,128)}', space=vmem, size = 0x12000, scoped, tag = 'internal scratch']
  %s0 = inlined_call_operand.hbm [shape: f32[16,16], index: 0, kind: input, shape index: {}]
  %s1 = inlined_call_operand.hbm [shape: f32[16,32], index: 1, kind: input, shape index: {}]
  %s2 = inlined_call_operand.vmem [shape: f32[1,32], index: 2, kind: input, shape index: {}]
  %s3 = inlined_call_operand.hbm [shape: f32[32,32], index: 3, kind: input, shape index: {}]
  %s4 = inlined_call_operand.vmem [shape: f32[1,32], index: 4, kind: input, shape index: {}]
  %s5 = inlined_call_operand.hbm [shape: f32[32,128], index: 5, kind: input, shape index: {}]
  %s6 = inlined_call_operand.vmem [shape: f32[1,128], index: 6, kind: input, shape index: {}]
  %s7 = inlined_call_operand.hbm [shape: f32[16,128], index: 7, kind: output, shape index: {}]
  %s8 = sld [smem:[#allocation0]]
  $region77: #{tpu_custom_call.1} parent=0
    _
  %s10 = ssub.s32 1, %s8
  %s11 = scalar_select 0, %s10, %s8
  $region1: #{tpu_custom_call.1} parent=0
    #allocation2 [shape = 'u8[8192]{0}', space=vmem, size = 0x2000, scoped, tag = 'input window, operand 0']
    #allocation3 [shape = 's32[2]{0}', space=sflag, size = 0x8, scoped, tag = 'scoped memory for tpu_custom_call.1']
    #allocation4 [shape = 's32[2]{0}', space=sflag, size = 0x8, scoped, tag = 'scoped memory for tpu_custom_call.1']
    #allocation5 [shape = 'u8[8192]{0}', space=vmem, size = 0x2000, scoped, tag = 'input window, operand 1, single buffered']
    #allocation6 [shape = 's32[1]{0}', space=sflag, size = 0x4, scoped, tag = 'scoped memory for tpu_custom_call.1']
    #allocation7 [shape = 'u8[16384]{0}', space=vmem, size = 0x4000, scoped, tag = 'input window, operand 3, single buffered']
    #allocation8 [shape = 'u8[16384]{0}', space=vmem, size = 0x4000, scoped, tag = 'input window, operand 5, single buffered']
    #allocation9 [shape = 's32[1]{0}', space=sflag, size = 0x4, scoped, tag = 'scoped memory for tpu_custom_call.1']
    #allocation10 [shape = 'u8[8192]{0}', space=vmem, size = 0x2000, scoped, tag = 'output window, operand 0']
    %12 = vsyncpa [#allocation3], 0
    %s13 = scalar_lea.sflag [#allocation3], 1
    %14 = vsyncpa %s13, 0
    %15 = vsyncpa [#allocation6], 0
    %16 = vsyncpa [#allocation9], 0
    %17 = vsyncpa [#allocation4], 0
    %s18 = scalar_lea.sflag [#allocation4], 1
    %19 = vsyncpa %s18, 0
    loop: start=0, step=1, limit=4
    $region2: #{tpu_custom_call.1} parent=1 // loop_pre_header
      _
    $region3: #{tpu_custom_call.1} parent=1 // loop_header
      %s21 = sphi 0, %s25
      %p22 = scmp.ge.s32.totalorder %s21, 4
      %s31 = sphi 0, %s33
      %s34 = sphi 0, %s31
      %s35 = sphi 0, %s34
      %s51 = sphi 0, %s35
      %s55 = sphi 0, %s55
      %s57 = sphi 0, %s55
      %s58 = sphi 0, %s57
      %s72 = sphi 0, %s58
      %s76 = sphi 0, %s76
      %s78 = sphi 0, %s76
      %s79 = sphi 0, %s78
      %s93 = sphi 0, %s79
      %s97 = sphi 0, %s97
      %s99 = sphi 0, %s97
      %s100 = sphi 0, %s99
      %s114 = sphi 0, %s100
      %s118 = sphi 0, %s118
      %s120 = sphi 0, %s118
      %s121 = sphi 0, %s120
      %s135 = sphi 0, %s121
      %s139 = sphi 0, %s139
      %s141 = sphi 0, %s139
      %s142 = sphi 0, %s141
      %s156 = sphi 0, %s142
      %s160 = sphi 0, %s160
      %s162 = sphi 0, %s160
      %s163 = sphi 0, %s162
      %s177 = sphi 0, %s163
      %s183 = sphi 0, %s185
      %s186 = sphi 0, %s183
      %s187 = sphi 0, %s186
      %s203 = sphi 0, %s187
    $region4: #{tpu_custom_call.1} parent=1 // loop_header_branch
      %24 = sbr.rel (%p22) target = $region8
    $region5: #{tpu_custom_call.1} parent=1 // loop_body
      %s26 = ssub.s32 %s21, 1
      %s27 = ssub.s32 %s21, 2
      %s28 = sadd.s32 %s21, 1
      %s29 = ssub.s32 %s21, %s28
      %p30 = scmp.eq.s32.totalorder %s29, 0
      %s32 = sadd.s32 %s31, 1
      %s33 = scalar_select %p30, %s31, %s32
      %p36 = pneg %p30
      %p37 = scmp.eq.s32.totalorder %s21, 1
      %p38 = por %p36, %p37
      %p39 = scmp.ne.s32.totalorder %s31, %s34
      %p40 = scmp.eq.s32.totalorder %s21, 0
      %p41 = por %p39, %p40
      %p42 = scmp.ne.s32.totalorder %s31, %s34
      %p43 = scmp.eq.s32.totalorder %s26, 1
      %p44 = por %p42, %p43
      %p45 = scmp.ne.s32.totalorder %s34, %s35
      %p46 = scmp.eq.s32.totalorder %s26, 0
      %p47 = por %p45, %p46
      %p48 = scmp.ne.s32.totalorder %s34, %s35
      %p49 = scmp.eq.s32.totalorder %s27, 1
      %p50 = por %p48, %p49
      %p52 = scmp.ne.s32.totalorder %s35, %s51
      %p53 = scmp.eq.s32.totalorder %s27, 0
      %p54 = por %p52, %p53
      %s56 = sadd.s32 %s55, 1
      %p59 = scmp.eq.s32.totalorder %s21, 1
      %p60 = scmp.ne.s32.totalorder %s55, %s57
      %p61 = scmp.eq.s32.totalorder %s21, 0
      %p62 = por %p60, %p61
      %p63 = scmp.ne.s32.totalorder %s55, %s57
      %p64 = scmp.eq.s32.totalorder %s26, 1
      %p65 = por %p63, %p64
      %p66 = scmp.ne.s32.totalorder %s57, %s58
      %p67 = scmp.eq.s32.totalorder %s26, 0
      %p68 = por %p66, %p67
      %p69 = scmp.ne.s32.totalorder %s57, %s58
      %p70 = scmp.eq.s32.totalorder %s27, 1
      %p71 = por %p69, %p70
      %p73 = scmp.ne.s32.totalorder %s58, %s72
      %p74 = scmp.eq.s32.totalorder %s27, 0
      %p75 = por %p73, %p74
      %s77 = sadd.s32 %s76, 1
      %p80 = scmp.eq.s32.totalorder %s21, 1
      %p81 = scmp.ne.s32.totalorder %s76, %s78
      %p82 = scmp.eq.s32.totalorder %s21, 0
      %p83 = por %p81, %p82
      %p84 = scmp.ne.s32.totalorder %s76, %s78
      %p85 = scmp.eq.s32.totalorder %s26, 1
      %p86 = por %p84, %p85
      %p87 = scmp.ne.s32.totalorder %s78, %s79
      %p88 = scmp.eq.s32.totalorder %s26, 0
      %p89 = por %p87, %p88
      %p90 = scmp.ne.s32.totalorder %s78, %s79
      %p91 = scmp.eq.s32.totalorder %s27, 1
      %p92 = por %p90, %p91
      %p94 = scmp.ne.s32.totalorder %s79, %s93
      %p95 = scmp.eq.s32.totalorder %s27, 0
      %p96 = por %p94, %p95
      %s98 = sadd.s32 %s97, 1
      %p101 = scmp.eq.s32.totalorder %s21, 1
      %p102 = scmp.ne.s32.totalorder %s97, %s99
      %p103 = scmp.eq.s32.totalorder %s21, 0
      %p104 = por %p102, %p103
      %p105 = scmp.ne.s32.totalorder %s97, %s99
      %p106 = scmp.eq.s32.totalorder %s26, 1
      %p107 = por %p105, %p106
      %p108 = scmp.ne.s32.totalorder %s99, %s100
      %p109 = scmp.eq.s32.totalorder %s26, 0
      %p110 = por %p108, %p109
      %p111 = scmp.ne.s32.totalorder %s99, %s100
      %p112 = scmp.eq.s32.totalorder %s27, 1
      %p113 = por %p111, %p112
      %p115 = scmp.ne.s32.totalorder %s100, %s114
      %p116 = scmp.eq.s32.totalorder %s27, 0
      %p117 = por %p115, %p116
      %s119 = sadd.s32 %s118, 1
      %p122 = scmp.eq.s32.totalorder %s21, 1
      %p123 = scmp.ne.s32.totalorder %s118, %s120
      %p124 = scmp.eq.s32.totalorder %s21, 0
      %p125 = por %p123, %p124
      %p126 = scmp.ne.s32.totalorder %s118, %s120
      %p127 = scmp.eq.s32.totalorder %s26, 1
      %p128 = por %p126, %p127
      %p129 = scmp.ne.s32.totalorder %s120, %s121
      %p130 = scmp.eq.s32.totalorder %s26, 0
      %p131 = por %p129, %p130
      %p132 = scmp.ne.s32.totalorder %s120, %s121
      %p133 = scmp.eq.s32.totalorder %s27, 1
      %p134 = por %p132, %p133
      %p136 = scmp.ne.s32.totalorder %s121, %s135
      %p137 = scmp.eq.s32.totalorder %s27, 0
      %p138 = por %p136, %p137
      %s140 = sadd.s32 %s139, 1
      %p143 = scmp.eq.s32.totalorder %s21, 1
      %p144 = scmp.ne.s32.totalorder %s139, %s141
      %p145 = scmp.eq.s32.totalorder %s21, 0
      %p146 = por %p144, %p145
      %p147 = scmp.ne.s32.totalorder %s139, %s141
      %p148 = scmp.eq.s32.totalorder %s26, 1
      %p149 = por %p147, %p148
      %p150 = scmp.ne.s32.totalorder %s141, %s142
      %p151 = scmp.eq.s32.totalorder %s26, 0
      %p152 = por %p150, %p151
      %p153 = scmp.ne.s32.totalorder %s141, %s142
      %p154 = scmp.eq.s32.totalorder %s27, 1
      %p155 = por %p153, %p154
      %p157 = scmp.ne.s32.totalorder %s142, %s156
      %p158 = scmp.eq.s32.totalorder %s27, 0
      %p159 = por %p157, %p158
      %s161 = sadd.s32 %s160, 1
      %p164 = scmp.eq.s32.totalorder %s21, 1
      %p165 = scmp.ne.s32.totalorder %s160, %s162
      %p166 = scmp.eq.s32.totalorder %s21, 0
      %p167 = por %p165, %p166
      %p168 = scmp.ne.s32.totalorder %s160, %s162
      %p169 = scmp.eq.s32.totalorder %s26, 1
      %p170 = por %p168, %p169
      %p171 = scmp.ne.s32.totalorder %s162, %s163
      %p172 = scmp.eq.s32.totalorder %s26, 0
      %p173 = por %p171, %p172
      %p174 = scmp.ne.s32.totalorder %s162, %s163
      %p175 = scmp.eq.s32.totalorder %s27, 1
      %p176 = por %p174, %p175
      %p178 = scmp.ne.s32.totalorder %s163, %s177
      %p179 = scmp.eq.s32.totalorder %s27, 0
      %p180 = por %p178, %p179
      %s181 = ssub.s32 %s21, %s28
      %p182 = scmp.eq.s32.totalorder %s181, 0
      %s184 = sadd.s32 %s183, 1
      %s185 = scalar_select %p182, %s183, %s184
      %p188 = pneg %p182
      %p189 = scmp.eq.s32.totalorder %s21, 1
      %p190 = por %p188, %p189
      %p191 = scmp.ne.s32.totalorder %s183, %s186
      %p192 = scmp.eq.s32.totalorder %s21, 0
      %p193 = por %p191, %p192
      %p194 = scmp.ne.s32.totalorder %s183, %s186
      %p195 = scmp.eq.s32.totalorder %s26, 1
      %p196 = por %p194, %p195
      %p197 = scmp.ne.s32.totalorder %s186, %s187
      %p198 = scmp.eq.s32.totalorder %s26, 0
      %p199 = por %p197, %p198
      %p200 = scmp.ne.s32.totalorder %s186, %s187
      %p201 = scmp.eq.s32.totalorder %s27, 1
      %p202 = por %p200, %p201
      %p204 = scmp.ne.s32.totalorder %s187, %s203
      %p205 = scmp.eq.s32.totalorder %s27, 0
      %p206 = por %p204, %p205
      %p207 = scmp.le.s32.totalorder 1, %s21
      %p208 = scmp.lt.s32.totalorder %s21, 3
      %p209 = pnand %p207, %p208
      %p210 = pneg %p209
      // Predicated region
      $region9: #{tpu_custom_call.1} parent=5 // pred_check
        _
      $region10: #{tpu_custom_call.1} parent=5 // pred_check_branch
        %212 = sbr.rel (%p209) target = $region12
      $region11: #{tpu_custom_call.1} parent=5 // pred_region
        %s213 = ssub.s32 %s21, 1
        // Predicated region
        $region13: #{tpu_custom_call.1} parent=11 // pred_check
          %p214 = pneg %p68
        $region14: #{tpu_custom_call.1} parent=11 // pred_check_branch
          %216 = sbr.rel (%p214) target = $region16
        $region15: #{tpu_custom_call.1} parent=11 // pred_region
          %s218 = ssub.s32 256, 256
          %219 = vsyncadd [#allocation6], %s218
          %s220 = sshll.u32 [#allocation5], 4
          %s221 = int_to_ptr.vmem [resolvable:$true] %s220
          %226 = dma.hbm_to_vmem [thread:$0]  %s1, 256, %s221, [#allocation6], 128, 128, 8
        $region16: #{tpu_custom_call.1} parent=11 // pred_fallthru
          _
        // Predicated region
        $region17: #{tpu_custom_call.1} parent=11 // pred_check
          %p227 = pneg %p89
        $region18: #{tpu_custom_call.1} parent=11 // pred_check_branch
          %229 = sbr.rel (%p227) target = $region20
        $region19: #{tpu_custom_call.1} parent=11 // pred_region
          _
        $region20: #{tpu_custom_call.1} parent=11 // pred_fallthru
          _
        // Predicated region
        $region21: #{tpu_custom_call.1} parent=11 // pred_check
          %p230 = pneg %p110
        $region22: #{tpu_custom_call.1} parent=11 // pred_check_branch
          %232 = sbr.rel (%p230) target = $region24
        $region23: #{tpu_custom_call.1} parent=11 // pred_region
          %s234 = ssub.s32 512, 512
          %235 = vsyncadd [#allocation6], %s234
          %s236 = sshll.u32 [#allocation7], 4
          %s237 = int_to_ptr.vmem [resolvable:$true] %s236
          %242 = dma.hbm_to_vmem [thread:$0]  %s3, 512, %s237, [#allocation6], 128, 128, 8
        $region24: #{tpu_custom_call.1} parent=11 // pred_fallthru
          _
        // Predicated region
        $region25: #{tpu_custom_call.1} parent=11 // pred_check
          %p243 = pneg %p131
        $region26: #{tpu_custom_call.1} parent=11 // pred_check_branch
          %245 = sbr.rel (%p243) target = $region28
        $region27: #{tpu_custom_call.1} parent=11 // pred_region
          _
        $region28: #{tpu_custom_call.1} parent=11 // pred_fallthru
          _
        // Predicated region
        $region29: #{tpu_custom_call.1} parent=11 // pred_check
          %p246 = pneg %p152
        $region30: #{tpu_custom_call.1} parent=11 // pred_check_branch
          %248 = sbr.rel (%p246) target = $region32
        $region31: #{tpu_custom_call.1} parent=11 // pred_region
          %s250 = ssub.s32 512, 512
          %251 = vsyncadd [#allocation9], %s250
          %s252 = sshll.u32 [#allocation8], 4
          %s253 = int_to_ptr.vmem [resolvable:$true] %s252
          %258 = dma.hbm_to_vmem [thread:$0]  %s5, 512, %s253, [#allocation9], 128, 128, 8
        $region32: #{tpu_custom_call.1} parent=11 // pred_fallthru
          _
        // Predicated region
        $region33: #{tpu_custom_call.1} parent=11 // pred_check
          %p259 = pneg %p173
        $region34: #{tpu_custom_call.1} parent=11 // pred_check_branch
          %261 = sbr.rel (%p259) target = $region36
        $region35: #{tpu_custom_call.1} parent=11 // pred_region
          _
        $region36: #{tpu_custom_call.1} parent=11 // pred_fallthru
          _
      $region12: #{tpu_custom_call.1} parent=5 // pred_fallthru
        _
      %p262 = scmp.lt.s32.totalorder %s21, 2
      // Predicated region
      $region37: #{tpu_custom_call.1} parent=5 // pred_check
        %p263 = pneg %p262
      $region38: #{tpu_custom_call.1} parent=5 // pred_check_branch
        %265 = sbr.rel (%p263) target = $region40
      $region39: #{tpu_custom_call.1} parent=5 // pred_region
        // Predicated region
        $region41: #{tpu_custom_call.1} parent=39 // pred_check
          %p266 = pneg %p41
        $region42: #{tpu_custom_call.1} parent=39 // pred_check_branch
          %268 = sbr.rel (%p266) target = $region44
        $region43: #{tpu_custom_call.1} parent=39 // pred_region
          %s269 = sand.u32 %s31, 1
          %s270 = scalar_lea.sflag [#allocation3], %s269
          %s271 = sand.u32 %s31, 1
          %s272 = smul.addr %s271, 8
          %s273 = scalar_lea.vmem [#allocation2], %s272
          %s275 = ssub.s32 128, 128
          %276 = vsyncadd %s270, %s275
          %s277 = smul.addr %s21, 128
          %s278 = scalar_lea.hbm %s0, %s277
          %s280 = sshll.u32 %s273, 4
          %s281 = int_to_ptr.vmem [resolvable:$true] %s280
          %283 = dma.hbm_to_vmem [thread:$0]  %s278, 128, %s281, %s270
        $region44: #{tpu_custom_call.1} parent=39 // pred_fallthru
          _
      $region40: #{tpu_custom_call.1} parent=5 // pred_fallthru
        _
      %p284 = scmp.le.s32.totalorder 1, %s21
      %p285 = scmp.lt.s32.totalorder %s21, 3
      %p286 = pnand %p284, %p285
      %p287 = pneg %p286
      // Predicated region
      $region45: #{tpu_custom_call.1} parent=5 // pred_check
        _
      $region46: #{tpu_custom_call.1} parent=5 // pred_check_branch
        %289 = sbr.rel (%p286) target = $region48
      $region47: #{tpu_custom_call.1} parent=5 // pred_region
        %s290 = ssub.s32 %s21, 1
        %s291 = sand.u32 %s34, 1
        %s292 = scalar_lea.sflag [#allocation3], %s291
        %s293 = sand.u32 %s34, 1
        %s294 = smul.addr %s293, 8
        %s295 = scalar_lea.vmem [#allocation2], %s294
        // Predicated region
        $region49: #{tpu_custom_call.1} parent=47 // pred_check
          %p296 = pneg %p47
        $region50: #{tpu_custom_call.1} parent=47 // pred_check_branch
          %298 = sbr.rel (%p296) target = $region52
        $region51: #{tpu_custom_call.1} parent=47 // pred_region
          %299 = dma.done %s292, 128
        $region52: #{tpu_custom_call.1} parent=47 // pred_fallthru
          _
        // Predicated region
        $region53: #{tpu_custom_call.1} parent=47 // pred_check
          %p300 = pneg %p68
        $region54: #{tpu_custom_call.1} parent=47 // pred_check_branch
          %302 = sbr.rel (%p300) target = $region56
        $region55: #{tpu_custom_call.1} parent=47 // pred_region
          %303 = dma.done [#allocation6], 256
        $region56: #{tpu_custom_call.1} parent=47 // pred_fallthru
          _
        // Predicated region
        $region57: #{tpu_custom_call.1} parent=47 // pred_check
          %p304 = pneg %p110
        $region58: #{tpu_custom_call.1} parent=47 // pred_check_branch
          %306 = sbr.rel (%p304) target = $region60
        $region59: #{tpu_custom_call.1} parent=47 // pred_region
          %307 = dma.done [#allocation6], 512
        $region60: #{tpu_custom_call.1} parent=47 // pred_fallthru
          _
        // Predicated region
        $region61: #{tpu_custom_call.1} parent=47 // pred_check
          %p308 = pneg %p152
        $region62: #{tpu_custom_call.1} parent=47 // pred_check_branch
          %310 = sbr.rel (%p308) target = $region64
        $region63: #{tpu_custom_call.1} parent=47 // pred_region
          %311 = dma.done [#allocation9], 512
        $region64: #{tpu_custom_call.1} parent=47 // pred_fallthru
          _
        %s312 = sand.u32 %s34, 1
        %s313 = scalar_lea.sflag [#allocation3], %s312
        %s314 = sand.u32 %s34, 1
        %s315 = smul.addr %s314, 8
        %s316 = scalar_lea.vmem [#allocation2], %s315
        %p317 = pneg %p47
        %p318 = pneg %p44
        %p319 = pneg %p68
        %p320 = pneg %p65
        %p321 = pneg %p89
        %p322 = pneg %p86
        %p323 = pneg %p110
        %p324 = pneg %p107
        %p325 = pneg %p131
        %p326 = pneg %p128
        %p327 = pneg %p152
        %p328 = pneg %p149
        %p329 = pneg %p173
        %p330 = pneg %p170
        %p331 = pneg %p199
        %p332 = pneg %p196
        %s333 = sand.u32 %s186, 1
        %s334 = scalar_lea.sflag [#allocation4], %s333
        %s335 = sand.u32 %s186, 1
        %s336 = smul.addr %s335, 8
        %s337 = scalar_lea.vmem [#allocation10], %s336
        %v338 = vld [vmem:[%s295] sm:$0xff]
        %v339 = vld [vmem:[#allocation5] sm:$0xff]
        %v340 = vld [vmem:[#allocation5 + $0x8] sm:$0xff]
        %v341 = vld [vmem:[%s2] sm:$0x1]
        %v343 = vlaneseq
        %v344 = vshrl.u32 %v343, 7
        %v345 = vsub.s32 0, %v344
        %v346 = vrot.slane %v341, %v345
        %vm348 = vcmask 130048
        %v350 = vsel %vm348, %v338, 0
        %352 = vmatprep.subr.mxu0 0.0
        %353 = vmatpush1.msra.mxu0 %v339
        %354 = vmatprep.subr.mxu0 0.0
        %355 = vmatpush1.msra.mxu0 %v340
        %356 = vmatprep.subr.mxu0 0.0
        %357 = vmatpush1.msra.mxu0 0.0
        %358 = vmatprep.subr.mxu0 0.0
        %359 = vmatpush1.msra.mxu0 0.0
        %360 = vmatprep.subr.mxu0 0.0
        %361 = vmatpush1.msra.mxu0 0.0
        %362 = vmatprep.subr.mxu0 0.0
        %363 = vmatpush1.msra.mxu0 0.0
        %364 = vmatprep.subr.mxu0 0.0
        %365 = vmatpush1.msra.mxu0 0.0
        %366 = vmatprep.subr.mxu0 0.0
        %367 = vmatpush1.msra.mxu0 0.0
        %368 = vmatprep.subr.mxu0 0.0
        %369 = vmatpush1.msra.mxu0 0.0
        %370 = vmatprep.subr.mxu0 0.0
        %371 = vmatpush1.msra.mxu0 0.0
        %372 = vmatprep.subr.mxu0 0.0
        %373 = vmatpush1.msra.mxu0 0.0
        %374 = vmatprep.subr.mxu0 0.0
        %375 = vmatpush1.msra.mxu0 0.0
        %376 = vmatprep.subr.mxu0 0.0
        %377 = vmatpush1.msra.mxu0 0.0
        %378 = vmatprep.subr.mxu0 0.0
        %379 = vmatpush1.msra.mxu0 0.0
        %380 = vmatprep.subr.mxu0 0.0
        %381 = vmatpush1.msra.mxu0 0.0
        %382 = vmatprep.subr.mxu0 0.0
        %383 = vmatpush1.msra.mxu0 0.0
        %384 = vmatprep.subr.mxu0 0.0
        %385 = vmatpush1.msra.mxu0 0.0
        %386 = vmatprep.subr.mxu0 0.0
        %387 = vmatpush1.msra.mxu0 0.0
        %388 = vmatprep.subr.mxu0 0.0
        %389 = vmatpush1.msra.mxu0 0.0
        %390 = vmatprep.subr.mxu0 0.0
        %391 = vmatpush1.msra.mxu0 0.0
        %392 = vmatprep.subr.mxu0 0.0
        %393 = vmatpush1.msra.mxu0 0.0
        %394 = vmatprep.subr.mxu0 0.0
        %395 = vmatpush1.msra.mxu0 0.0
        %396 = vmatprep.subr.mxu0 0.0
        %397 = vmatpush1.msra.mxu0 0.0
        %398 = vmatprep.subr.mxu0 0.0
        %399 = vmatpush1.msra.mxu0 0.0
        %400 = vmatprep.subr.mxu0 0.0
        %401 = vmatpush1.msra.mxu0 0.0
        %402 = vmatprep.subr.mxu0 0.0
        %403 = vmatpush1.msra.mxu0 0.0
        %404 = vmatprep.subr.mxu0 0.0
        %405 = vmatpush1.msra.mxu0 0.0
        %406 = vmatprep.subr.mxu0 0.0
        %407 = vmatpush1.msra.mxu0 0.0
        %408 = vmatprep.subr.mxu0 0.0
        %409 = vmatpush1.msra.mxu0 0.0
        %410 = vmatprep.subr.mxu0 0.0
        %411 = vmatpush1.msra.mxu0 0.0
        %412 = vmatprep.subr.mxu0 0.0
        %413 = vmatpush1.msra.mxu0 0.0
        %414 = vmatprep.subr.mxu0 0.0
        %415 = vmatpush1.msra.mxu0 0.0
        %416 = vmatprep.mubr.f32.mxu0 0.0
        %417 = vmatmul.mubr.f32.gmra.mrb[0].mxu0 %v350
        %v418 = vpop.f32.mrb[0].mxu0
        %v419 = vadd.f32 %v346, %v418
        %v420 = vpop.f32.mrb[0].mxu0
        %421 = vdwg.mxu0
        %v422 = vmul.f32 %v419, 0.5
        %v423 = vmul.f32 %v419, 0.70710677
        %v424 = verf.f32.pop %v423
        %v425 = vadd.f32 %v424, 1.0
        %v426 = vmul.f32 %v422, %v425
        %v427 = vld [vmem:[#allocation7] sm:$0xff]
        %v428 = vld [vmem:[#allocation7 + $0x8] sm:$0xff]
        %v429 = vld [vmem:[#allocation7 + $0x10] sm:$0xff]
        %v430 = vld [vmem:[#allocation7 + $0x18] sm:$0xff]
        %v431 = vld [vmem:[%s4] sm:$0x1]
        %v433 = vlaneseq
        %v434 = vshrl.u32 %v433, 7
        %v435 = vsub.s32 0, %v434
        %v436 = vrot.slane %v431, %v435
        %vm438 = vcmask 261120
        %v440 = vsel %vm438, %v426, 0
        %442 = vmatprep.subr.mxu0 0.0
        %443 = vmatpush1.msra.mxu0 %v427
        %444 = vmatprep.subr.mxu0 0.0
        %445 = vmatpush1.msra.mxu0 %v428
        %446 = vmatprep.subr.mxu0 0.0
        %447 = vmatpush1.msra.mxu0 %v429
        %448 = vmatprep.subr.mxu0 0.0
        %449 = vmatpush1.msra.mxu0 %v430
        %450 = vmatprep.subr.mxu0 0.0
        %451 = vmatpush1.msra.mxu0 0.0
        %452 = vmatprep.subr.mxu0 0.0
        %453 = vmatpush1.msra.mxu0 0.0
        %454 = vmatprep.subr.mxu0 0.0
        %455 = vmatpush1.msra.mxu0 0.0
        %456 = vmatprep.subr.mxu0 0.0
        %457 = vmatpush1.msra.mxu0 0.0
        %458 = vmatprep.subr.mxu0 0.0
        %459 = vmatpush1.msra.mxu0 0.0
        %460 = vmatprep.subr.mxu0 0.0
        %461 = vmatpush1.msra.mxu0 0.0
        %462 = vmatprep.subr.mxu0 0.0
        %463 = vmatpush1.msra.mxu0 0.0
        %464 = vmatprep.subr.mxu0 0.0
        %465 = vmatpush1.msra.mxu0 0.0
        %466 = vmatprep.subr.mxu0 0.0
        %467 = vmatpush1.msra.mxu0 0.0
        %468 = vmatprep.subr.mxu0 0.0
        %469 = vmatpush1.msra.mxu0 0.0
        %470 = vmatprep.subr.mxu0 0.0
        %471 = vmatpush1.msra.mxu0 0.0
        %472 = vmatprep.subr.mxu0 0.0
        %473 = vmatpush1.msra.mxu0 0.0
        %474 = vmatprep.subr.mxu0 0.0
        %475 = vmatpush1.msra.mxu0 0.0
        %476 = vmatprep.subr.mxu0 0.0
        %477 = vmatpush1.msra.mxu0 0.0
        %478 = vmatprep.subr.mxu0 0.0
        %479 = vmatpush1.msra.mxu0 0.0
        %480 = vmatprep.subr.mxu0 0.0
        %481 = vmatpush1.msra.mxu0 0.0
        %482 = vmatprep.subr.mxu0 0.0
        %483 = vmatpush1.msra.mxu0 0.0
        %484 = vmatprep.subr.mxu0 0.0
        %485 = vmatpush1.msra.mxu0 0.0
        %486 = vmatprep.subr.mxu0 0.0
        %487 = vmatpush1.msra.mxu0 0.0
        %488 = vmatprep.subr.mxu0 0.0
        %489 = vmatpush1.msra.mxu0 0.0
        %490 = vmatprep.subr.mxu0 0.0
        %491 = vmatpush1.msra.mxu0 0.0
        %492 = vmatprep.subr.mxu0 0.0
        %493 = vmatpush1.msra.mxu0 0.0
        %494 = vmatprep.subr.mxu0 0.0
        %495 = vmatpush1.msra.mxu0 0.0
        %496 = vmatprep.subr.mxu0 0.0
        %497 = vmatpush1.msra.mxu0 0.0
        %498 = vmatprep.subr.mxu0 0.0
        %499 = vmatpush1.msra.mxu0 0.0
        %500 = vmatprep.subr.mxu0 0.0
        %501 = vmatpush1.msra.mxu0 0.0
        %502 = vmatprep.subr.mxu0 0.0
        %503 = vmatpush1.msra.mxu0 0.0
        %504 = vmatprep.subr.mxu0 0.0
        %505 = vmatpush1.msra.mxu0 0.0
        %506 = vmatprep.mubr.f32.mxu0 0.0
        %507 = vmatmul.mubr.f32.gmra.mrb[0].mxu0 %v440
        %v508 = vpop.f32.mrb[0].mxu0
        %v509 = vadd.f32 %v436, %v508
        %v510 = vpop.f32.mrb[0].mxu0
        %511 = vdwg.mxu0
        %v512 = vmul.f32 %v509, 0.5
        %v513 = vmul.f32 %v509, 0.70710677
        %v514 = verf.f32.pop %v513
        %v515 = vadd.f32 %v514, 1.0
        %v516 = vmul.f32 %v512, %v515
        %v517 = vld [vmem:[#allocation8] sm:$0xff]
        %v518 = vld [vmem:[#allocation8 + $0x8] sm:$0xff]
        %v519 = vld [vmem:[#allocation8 + $0x10] sm:$0xff]
        %v520 = vld [vmem:[#allocation8 + $0x18] sm:$0xff]
        %v521 = vld [vmem:[%s6] sm:$0x1]
        %v523 = vlaneseq
        %v524 = vshrl.u32 %v523, 7
        %v525 = vsub.s32 0, %v524
        %v526 = vrot.slane %v521, %v525
        %v529 = vsel %vm438, %v516, 0
        %531 = vmatprep.subr.mxu0 0.0
        %532 = vmatpush1.msra.mxu0 %v517
        %533 = vmatprep.subr.mxu0 0.0
        %534 = vmatpush1.msra.mxu0 %v518
        %535 = vmatprep.subr.mxu0 0.0
        %536 = vmatpush1.msra.mxu0 %v519
        %537 = vmatprep.subr.mxu0 0.0
        %538 = vmatpush1.msra.mxu0 %v520
        %539 = vmatprep.subr.mxu0 0.0
        %540 = vmatpush1.msra.mxu0 0.0
        %541 = vmatprep.subr.mxu0 0.0
        %542 = vmatpush1.msra.mxu0 0.0
        %543 = vmatprep.subr.mxu0 0.0
        %544 = vmatpush1.msra.mxu0 0.0
        %545 = vmatprep.subr.mxu0 0.0
        %546 = vmatpush1.msra.mxu0 0.0
        %547 = vmatprep.subr.mxu0 0.0
        %548 = vmatpush1.msra.mxu0 0.0
        %549 = vmatprep.subr.mxu0 0.0
        %550 = vmatpush1.msra.mxu0 0.0
        %551 = vmatprep.subr.mxu0 0.0
        %552 = vmatpush1.msra.mxu0 0.0
        %553 = vmatprep.subr.mxu0 0.0
        %554 = vmatpush1.msra.mxu0 0.0
        %555 = vmatprep.subr.mxu0 0.0
        %556 = vmatpush1.msra.mxu0 0.0
        %557 = vmatprep.subr.mxu0 0.0
        %558 = vmatpush1.msra.mxu0 0.0
        %559 = vmatprep.subr.mxu0 0.0
        %560 = vmatpush1.msra.mxu0 0.0
        %561 = vmatprep.subr.mxu0 0.0
        %562 = vmatpush1.msra.mxu0 0.0
        %563 = vmatprep.subr.mxu0 0.0
        %564 = vmatpush1.msra.mxu0 0.0
        %565 = vmatprep.subr.mxu0 0.0
        %566 = vmatpush1.msra.mxu0 0.0
        %567 = vmatprep.subr.mxu0 0.0
        %568 = vmatpush1.msra.mxu0 0.0
        %569 = vmatprep.subr.mxu0 0.0
        %570 = vmatpush1.msra.mxu0 0.0
        %571 = vmatprep.subr.mxu0 0.0
        %572 = vmatpush1.msra.mxu0 0.0
        %573 = vmatprep.subr.mxu0 0.0
        %574 = vmatpush1.msra.mxu0 0.0
        %575 = vmatprep.subr.mxu0 0.0
        %576 = vmatpush1.msra.mxu0 0.0
        %577 = vmatprep.subr.mxu0 0.0
        %578 = vmatpush1.msra.mxu0 0.0
        %579 = vmatprep.subr.mxu0 0.0
        %580 = vmatpush1.msra.mxu0 0.0
        %581 = vmatprep.subr.mxu0 0.0
        %582 = vmatpush1.msra.mxu0 0.0
        %583 = vmatprep.subr.mxu0 0.0
        %584 = vmatpush1.msra.mxu0 0.0
        %585 = vmatprep.subr.mxu0 0.0
        %586 = vmatpush1.msra.mxu0 0.0
        %587 = vmatprep.subr.mxu0 0.0
        %588 = vmatpush1.msra.mxu0 0.0
        %589 = vmatprep.subr.mxu0 0.0
        %590 = vmatpush1.msra.mxu0 0.0
        %591 = vmatprep.subr.mxu0 0.0
        %592 = vmatpush1.msra.mxu0 0.0
        %593 = vmatprep.subr.mxu0 0.0
        %594 = vmatpush1.msra.mxu0 0.0
        %595 = vmatprep.mubr.f32.mxu0 0.0
        %596 = vmatmul.mubr.f32.gmra.mrb[0].mxu0 %v529
        %v597 = vpop.f32.mrb[0].mxu0
        %v598 = vadd.f32 %v526, %v597
        %v599 = vpop.f32.mrb[0].mxu0
        %600 = vdwg.mxu0
        %601 = vst [vmem:[%s337] sm:$0xff] %v598
        %s602 = sand.u32 %s186, 1
        %s603 = scalar_lea.sflag [#allocation4], %s602
        %s604 = sand.u32 %s186, 1
        %s605 = smul.addr %s604, 8
        %s606 = scalar_lea.vmem [#allocation10], %s605
        // Predicated region
        $region65: #{tpu_custom_call.1} parent=47 // pred_check
          %p607 = pneg %p196
        $region66: #{tpu_custom_call.1} parent=47 // pred_check_branch
          %609 = sbr.rel (%p607) target = $region68
        $region67: #{tpu_custom_call.1} parent=47 // pred_region
          %s611 = ssub.s32 128, 128
          %612 = vsyncadd %s603, %s611
          %s613 = smul.addr %s26, 128
          %s614 = scalar_lea.hbm %s7, %s613
          %s616 = sshll.u32 %s606, 4
          %s617 = int_to_ptr.vmem [resolvable:$true] %s616
          %619 = dma.vmem_to_hbm [thread:$0]  %s617, 128, %s614, %s603
        $region68: #{tpu_custom_call.1} parent=47 // pred_fallthru
          _
      $region48: #{tpu_custom_call.1} parent=5 // pred_fallthru
        _
      %p620 = scmp.le.s32.totalorder 2, %s21
      // Predicated region
      $region69: #{tpu_custom_call.1} parent=5 // pred_check
        %p621 = pneg %p620
      $region70: #{tpu_custom_call.1} parent=5 // pred_check_branch
        %623 = sbr.rel (%p621) target = $region72
      $region71: #{tpu_custom_call.1} parent=5 // pred_region
        %s624 = ssub.s32 %s21, 2
        // Predicated region
        $region73: #{tpu_custom_call.1} parent=71 // pred_check
          %p625 = pneg %p202
        $region74: #{tpu_custom_call.1} parent=71 // pred_check_branch
          %627 = sbr.rel (%p625) target = $region76
        $region75: #{tpu_custom_call.1} parent=71 // pred_region
          %s628 = sand.u32 %s187, 1
          %s629 = scalar_lea.sflag [#allocation4], %s628
          %s630 = sand.u32 %s187, 1
          %s631 = smul.addr %s630, 8
          %s632 = scalar_lea.vmem [#allocation10], %s631
          %633 = dma.done %s629, 128
        $region76: #{tpu_custom_call.1} parent=71 // pred_fallthru
          _
      $region72: #{tpu_custom_call.1} parent=5 // pred_fallthru
        _
    $region6: #{tpu_custom_call.1} parent=1 // loop_footer
      %s25 = sadd.s32 1, %s21
    $region7: #{tpu_custom_call.1} parent=1 // loop_footer_branch
      %20 = sbr.rel target = $region3
    $region8: #{tpu_custom_call.1} parent=1 // loop_exit
      _
    %634 = vsyncpa [#allocation3], 1
    %s635 = scalar_lea.sflag [#allocation3], 1
    %636 = vsyncpa %s635, 1
    %637 = vsyncpa [#allocation6], 1
    %638 = vsyncpa [#allocation9], 1
    %639 = vsyncpa [#allocation4], 1
    %s640 = scalar_lea.sflag [#allocation4], 1
    %641 = vsyncpa %s640, 1

// kernel: tpu_custom_call.1
$region0: #{tpu_custom_call.1}
  #allocation0 [shape = 'u32[]', space=smem, size = 0x4, offset = 0x4, fixed_abs, tag = 'smem constant byte address 0x4 - core index']
  #allocation1 [shape = 'u32[144,128]{1,0:T(1,128)}', space=vmem, size = 0x12000, scoped, tag = 'internal scratch']
  %s0 = inlined_call_operand.hbm [shape: f32[16,16], index: 0, kind: input, shape index: {}]
  %s1 = inlined_call_operand.hbm [shape: f32[16,32], index: 1, kind: input, shape index: {}]
  %s2 = inlined_call_operand.vmem [shape: f32[1,32], index: 2, kind: input, shape index: {}]
  %s3 = inlined_call_operand.hbm [shape: f32[32,32], index: 3, kind: input, shape index: {}]
  %s4 = inlined_call_operand.vmem [shape: f32[1,32], index: 4, kind: input, shape index: {}]
  %s5 = inlined_call_operand.hbm [shape: f32[32,128], index: 5, kind: input, shape index: {}]
  %s6 = inlined_call_operand.vmem [shape: f32[1,128], index: 6, kind: input, shape index: {}]
  %s7 = inlined_call_operand.hbm [shape: f32[16,128], index: 7, kind: output, shape index: {}]
  %s8 = sld [smem:[#allocation0]]
  $region77: #{tpu_custom_call.1} parent=0
    _
  %s10 = ssub.s32 1, %s8
  %s11 = scalar_select 0, %s10, %s8
  $region1: #{tpu_custom_call.1} parent=0
    #allocation2 [shape = 'u8[8192]{0}', space=vmem, size = 0x2000, scoped, tag = 'input window, operand 0']
    #allocation3 [shape = 's32[2]{0}', space=sflag, size = 0x8, scoped, tag = 'scoped memory for tpu_custom_call.1']
    #allocation4 [shape = 's32[2]{0}', space=sflag, size = 0x8, scoped, tag = 'scoped memory for tpu_custom_call.1']
    #allocation5 [shape = 'u8[8192]{0}', space=vmem, size = 0x2000, scoped, tag = 'input window, operand 1, single buffered']
    #allocation6 [shape = 's32[1]{0}', space=sflag, size = 0x4, scoped, tag = 'scoped memory for tpu_custom_call.1']
    #allocation7 [shape = 'u8[16384]{0}', space=vmem, size = 0x4000, scoped, tag = 'input window, operand 3, single buffered']
    #allocation8 [shape = 'u8[16384]{0}', space=vmem, size = 0x4000, scoped, tag = 'input window, operand 5, single buffered']
    #allocation9 [shape = 's32[1]{0}', space=sflag, size = 0x4, scoped, tag = 'scoped memory for tpu_custom_call.1']
    #allocation10 [shape = 'u8[8192]{0}', space=vmem, size = 0x2000, scoped, tag = 'output window, operand 0']
    %12 = vsyncpa [#allocation3], 0
    %s13 = scalar_lea.sflag [#allocation3], 1
    %14 = vsyncpa %s13, 0
    %15 = vsyncpa [#allocation6], 0
    %16 = vsyncpa [#allocation9], 0
    %17 = vsyncpa [#allocation4], 0
    %s18 = scalar_lea.sflag [#allocation4], 1
    %19 = vsyncpa %s18, 0
    loop: start=0, step=1, limit=4
    $region2: #{tpu_custom_call.1} parent=1 // loop_pre_header
      _
    $region3: #{tpu_custom_call.1} parent=1 // loop_header
      %s21 = sphi 0, %s25
      %p22 = scmp.ge.s32.totalorder %s21, 4
      %s31 = sphi 0, %s33
      %s34 = sphi 0, %s31
      %s35 = sphi 0, %s34
      %s51 = sphi 0, %s35
      %s55 = sphi 0, %s55
      %s57 = sphi 0, %s55
      %s58 = sphi 0, %s57
      %s72 = sphi 0, %s58
      %s76 = sphi 0, %s76
      %s78 = sphi 0, %s76
      %s79 = sphi 0, %s78
      %s93 = sphi 0, %s79
      %s97 = sphi 0, %s97
      %s99 = sphi 0, %s97
      %s100 = sphi 0, %s99
      %s114 = sphi 0, %s100
      %s118 = sphi 0, %s118
      %s120 = sphi 0, %s118
      %s121 = sphi 0, %s120
      %s135 = sphi 0, %s121
      %s139 = sphi 0, %s139
      %s141 = sphi 0, %s139
      %s142 = sphi 0, %s141
      %s156 = sphi 0, %s142
      %s160 = sphi 0, %s160
      %s162 = sphi 0, %s160
      %s163 = sphi 0, %s162
      %s177 = sphi 0, %s163
      %s183 = sphi 0, %s185
      %s186 = sphi 0, %s183
      %s187 = sphi 0, %s186
      %s203 = sphi 0, %s187
    $region4: #{tpu_custom_call.1} parent=1 // loop_header_branch
      %24 = sbr.rel (%p22) target = $region8
    $region5: #{tpu_custom_call.1} parent=1 // loop_body
      %s26 = ssub.s32 %s21, 1
      %s27 = ssub.s32 %s21, 2
      %s28 = sadd.s32 %s21, 1
      %s29 = ssub.s32 %s21, %s28
      %p30 = scmp.eq.s32.totalorder %s29, 0
      %s32 = sadd.s32 %s31, 1
      %s33 = scalar_select %p30, %s31, %s32
      %p36 = pneg %p30
      %p37 = scmp.eq.s32.totalorder %s21, 1
      %p38 = por %p36, %p37
      %p39 = scmp.ne.s32.totalorder %s31, %s34
      %p40 = scmp.eq.s32.totalorder %s21, 0
      %p41 = por %p39, %p40
      %p42 = scmp.ne.s32.totalorder %s31, %s34
      %p43 = scmp.eq.s32.totalorder %s26, 1
      %p44 = por %p42, %p43
      %p45 = scmp.ne.s32.totalorder %s34, %s35
      %p46 = scmp.eq.s32.totalorder %s26, 0
      %p47 = por %p45, %p46
      %p48 = scmp.ne.s32.totalorder %s34, %s35
      %p49 = scmp.eq.s32.totalorder %s27, 1
      %p50 = por %p48, %p49
      %p52 = scmp.ne.s32.totalorder %s35, %s51
      %p53 = scmp.eq.s32.totalorder %s27, 0
      %p54 = por %p52, %p53
      %s56 = sadd.s32 %s55, 1
      %p59 = scmp.eq.s32.totalorder %s21, 1
      %p60 = scmp.ne.s32.totalorder %s55, %s57
      %p61 = scmp.eq.s32.totalorder %s21, 0
      %p62 = por %p60, %p61
      %p63 = scmp.ne.s32.totalorder %s55, %s57
      %p64 = scmp.eq.s32.totalorder %s26, 1
      %p65 = por %p63, %p64
      %p66 = scmp.ne.s32.totalorder %s57, %s58
      %p67 = scmp.eq.s32.totalorder %s26, 0
      %p68 = por %p66, %p67
      %p69 = scmp.ne.s32.totalorder %s57, %s58
      %p70 = scmp.eq.s32.totalorder %s27, 1
      %p71 = por %p69, %p70
      %p73 = scmp.ne.s32.totalorder %s58, %s72
      %p74 = scmp.eq.s32.totalorder %s27, 0
      %p75 = por %p73, %p74
      %s77 = sadd.s32 %s76, 1
      %p80 = scmp.eq.s32.totalorder %s21, 1
      %p81 = scmp.ne.s32.totalorder %s76, %s78
      %p82 = scmp.eq.s32.totalorder %s21, 0
      %p83 = por %p81, %p82
      %p84 = scmp.ne.s32.totalorder %s76, %s78
      %p85 = scmp.eq.s32.totalorder %s26, 1
      %p86 = por %p84, %p85
      %p87 = scmp.ne.s32.totalorder %s78, %s79
      %p88 = scmp.eq.s32.totalorder %s26, 0
      %p89 = por %p87, %p88
      %p90 = scmp.ne.s32.totalorder %s78, %s79
      %p91 = scmp.eq.s32.totalorder %s27, 1
      %p92 = por %p90, %p91
      %p94 = scmp.ne.s32.totalorder %s79, %s93
      %p95 = scmp.eq.s32.totalorder %s27, 0
      %p96 = por %p94, %p95
      %s98 = sadd.s32 %s97, 1
      %p101 = scmp.eq.s32.totalorder %s21, 1
      %p102 = scmp.ne.s32.totalorder %s97, %s99
      %p103 = scmp.eq.s32.totalorder %s21, 0
      %p104 = por %p102, %p103
      %p105 = scmp.ne.s32.totalorder %s97, %s99
      %p106 = scmp.eq.s32.totalorder %s26, 1
      %p107 = por %p105, %p106
      %p108 = scmp.ne.s32.totalorder %s99, %s100
      %p109 = scmp.eq.s32.totalorder %s26, 0
      %p110 = por %p108, %p109
      %p111 = scmp.ne.s32.totalorder %s99, %s100
      %p112 = scmp.eq.s32.totalorder %s27, 1
      %p113 = por %p111, %p112
      %p115 = scmp.ne.s32.totalorder %s100, %s114
      %p116 = scmp.eq.s32.totalorder %s27, 0
      %p117 = por %p115, %p116
      %s119 = sadd.s32 %s118, 1
      %p122 = scmp.eq.s32.totalorder %s21, 1
      %p123 = scmp.ne.s32.totalorder %s118, %s120
      %p124 = scmp.eq.s32.totalorder %s21, 0
      %p125 = por %p123, %p124
      %p126 = scmp.ne.s32.totalorder %s118, %s120
      %p127 = scmp.eq.s32.totalorder %s26, 1
      %p128 = por %p126, %p127
      %p129 = scmp.ne.s32.totalorder %s120, %s121
      %p130 = scmp.eq.s32.totalorder %s26, 0
      %p131 = por %p129, %p130
      %p132 = scmp.ne.s32.totalorder %s120, %s121
      %p133 = scmp.eq.s32.totalorder %s27, 1
      %p134 = por %p132, %p133
      %p136 = scmp.ne.s32.totalorder %s121, %s135
      %p137 = scmp.eq.s32.totalorder %s27, 0
      %p138 = por %p136, %p137
      %s140 = sadd.s32 %s139, 1
      %p143 = scmp.eq.s32.totalorder %s21, 1
      %p144 = scmp.ne.s32.totalorder %s139, %s141
      %p145 = scmp.eq.s32.totalorder %s21, 0
      %p146 = por %p144, %p145
      %p147 = scmp.ne.s32.totalorder %s139, %s141
      %p148 = scmp.eq.s32.totalorder %s26, 1
      %p149 = por %p147, %p148
      %p150 = scmp.ne.s32.totalorder %s141, %s142
      %p151 = scmp.eq.s32.totalorder %s26, 0
      %p152 = por %p150, %p151
      %p153 = scmp.ne.s32.totalorder %s141, %s142
      %p154 = scmp.eq.s32.totalorder %s27, 1
      %p155 = por %p153, %p154
      %p157 = scmp.ne.s32.totalorder %s142, %s156
      %p158 = scmp.eq.s32.totalorder %s27, 0
      %p159 = por %p157, %p158
      %s161 = sadd.s32 %s160, 1
      %p164 = scmp.eq.s32.totalorder %s21, 1
      %p165 = scmp.ne.s32.totalorder %s160, %s162
      %p166 = scmp.eq.s32.totalorder %s21, 0
      %p167 = por %p165, %p166
      %p168 = scmp.ne.s32.totalorder %s160, %s162
      %p169 = scmp.eq.s32.totalorder %s26, 1
      %p170 = por %p168, %p169
      %p171 = scmp.ne.s32.totalorder %s162, %s163
      %p172 = scmp.eq.s32.totalorder %s26, 0
      %p173 = por %p171, %p172
      %p174 = scmp.ne.s32.totalorder %s162, %s163
      %p175 = scmp.eq.s32.totalorder %s27, 1
      %p176 = por %p174, %p175
      %p178 = scmp.ne.s32.totalorder %s163, %s177
      %p179 = scmp.eq.s32.totalorder %s27, 0
      %p180 = por %p178, %p179
      %s181 = ssub.s32 %s21, %s28
      %p182 = scmp.eq.s32.totalorder %s181, 0
      %s184 = sadd.s32 %s183, 1
      %s185 = scalar_select %p182, %s183, %s184
      %p188 = pneg %p182
      %p189 = scmp.eq.s32.totalorder %s21, 1
      %p190 = por %p188, %p189
      %p191 = scmp.ne.s32.totalorder %s183, %s186
      %p192 = scmp.eq.s32.totalorder %s21, 0
      %p193 = por %p191, %p192
      %p194 = scmp.ne.s32.totalorder %s183, %s186
      %p195 = scmp.eq.s32.totalorder %s26, 1
      %p196 = por %p194, %p195
      %p197 = scmp.ne.s32.totalorder %s186, %s187
      %p198 = scmp.eq.s32.totalorder %s26, 0
      %p199 = por %p197, %p198
      %p200 = scmp.ne.s32.totalorder %s186, %s187
      %p201 = scmp.eq.s32.totalorder %s27, 1
      %p202 = por %p200, %p201
      %p204 = scmp.ne.s32.totalorder %s187, %s203
      %p205 = scmp.eq.s32.totalorder %s27, 0
      %p206 = por %p204, %p205
      %p207 = scmp.le.s32.totalorder 1, %s21
      %p208 = scmp.lt.s32.totalorder %s21, 3
      %p209 = pnand %p207, %p208
      %p210 = pneg %p209
      // Predicated region
      $region9: #{tpu_custom_call.1} parent=5 // pred_check
        _
      $region10: #{tpu_custom_call.1} parent=5 // pred_check_branch
        %212 = sbr.rel (%p209) target = $region12
      $region11: #{tpu_custom_call.1} parent=5 // pred_region
        %s213 = ssub.s32 %s21, 1
        // Predicated region
        $region13: #{tpu_custom_call.1} parent=11 // pred_check
          %p214 = pneg %p68
        $region14: #{tpu_custom_call.1} parent=11 // pred_check_branch
          %216 = sbr.rel (%p214) target = $region16
        $region15: #{tpu_custom_call.1} parent=11 // pred_region
          %s218 = ssub.s32 256, 256
          %219 = vsyncadd [#allocation6], %s218
          %s220 = sshll.u32 [#allocation5], 4
          %s221 = int_to_ptr.vmem [resolvable:$true] %s220
          %226 = dma.hbm_to_vmem [thread:$0]  %s1, 256, %s221, [#allocation6], 128, 128, 8
        $region16: #{tpu_custom_call.1} parent=11 // pred_fallthru
          _
        // Predicated region
        $region17: #{tpu_custom_call.1} parent=11 // pred_check
          %p227 = pneg %p89
        $region18: #{tpu_custom_call.1} parent=11 // pred_check_branch
          %229 = sbr.rel (%p227) target = $region20
        $region19: #{tpu_custom_call.1} parent=11 // pred_region
          _
        $region20: #{tpu_custom_call.1} parent=11 // pred_fallthru
          _
        // Predicated region
        $region21: #{tpu_custom_call.1} parent=11 // pred_check
          %p230 = pneg %p110
        $region22: #{tpu_custom_call.1} parent=11 // pred_check_branch
          %232 = sbr.rel (%p230) target = $region24
        $region23: #{tpu_custom_call.1} parent=11 // pred_region
          %s234 = ssub.s32 512, 512
          %235 = vsyncadd [#allocation6], %s234
          %s236 = sshll.u32 [#allocation7], 4
          %s237 = int_to_ptr.vmem [resolvable:$true] %s236
          %242 = dma.hbm_to_vmem [thread:$0]  %s3, 512, %s237, [#allocation6], 128, 128, 8
        $region24: #{tpu_custom_call.1} parent=11 // pred_fallthru
          _
        // Predicated region
        $region25: #{tpu_custom_call.1} parent=11 // pred_check
          %p243 = pneg %p131
        $region26: #{tpu_custom_call.1} parent=11 // pred_check_branch
          %245 = sbr.rel (%p243) target = $region28
        $region27: #{tpu_custom_call.1} parent=11 // pred_region
          _
        $region28: #{tpu_custom_call.1} parent=11 // pred_fallthru
          _
        // Predicated region
        $region29: #{tpu_custom_call.1} parent=11 // pred_check
          %p246 = pneg %p152
        $region30: #{tpu_custom_call.1} parent=11 // pred_check_branch
          %248 = sbr.rel (%p246) target = $region32
        $region31: #{tpu_custom_call.1} parent=11 // pred_region
          %s250 = ssub.s32 512, 512
          %251 = vsyncadd [#allocation9], %s250
          %s252 = sshll.u32 [#allocation8], 4
          %s253 = int_to_ptr.vmem [resolvable:$true] %s252
          %258 = dma.hbm_to_vmem [thread:$0]  %s5, 512, %s253, [#allocation9], 128, 128, 8
        $region32: #{tpu_custom_call.1} parent=11 // pred_fallthru
          _
        // Predicated region
        $region33: #{tpu_custom_call.1} parent=11 // pred_check
          %p259 = pneg %p173
        $region34: #{tpu_custom_call.1} parent=11 // pred_check_branch
          %261 = sbr.rel (%p259) target = $region36
        $region35: #{tpu_custom_call.1} parent=11 // pred_region
          _
        $region36: #{tpu_custom_call.1} parent=11 // pred_fallthru
          _
      $region12: #{tpu_custom_call.1} parent=5 // pred_fallthru
        _
      %p262 = scmp.lt.s32.totalorder %s21, 2
      // Predicated region
      $region37: #{tpu_custom_call.1} parent=5 // pred_check
        %p263 = pneg %p262
      $region38: #{tpu_custom_call.1} parent=5 // pred_check_branch
        %265 = sbr.rel (%p263) target = $region40
      $region39: #{tpu_custom_call.1} parent=5 // pred_region
        // Predicated region
        $region41: #{tpu_custom_call.1} parent=39 // pred_check
          %p266 = pneg %p41
        $region42: #{tpu_custom_call.1} parent=39 // pred_check_branch
          %268 = sbr.rel (%p266) target = $region44
        $region43: #{tpu_custom_call.1} parent=39 // pred_region
          %s269 = sand.u32 %s31, 1
          %s270 = scalar_lea.sflag [#allocation3], %s269
          %s271 = sand.u32 %s31, 1
          %s272 = smul.addr %s271, 8
          %s273 = scalar_lea.vmem [#allocation2], %s272
          %s275 = ssub.s32 128, 128
          %276 = vsyncadd %s270, %s275
          %s277 = smul.addr %s21, 128
          %s278 = scalar_lea.hbm %s0, %s277
          %s280 = sshll.u32 %s273, 4
          %s281 = int_to_ptr.vmem [resolvable:$true] %s280
          %283 = dma.hbm_to_vmem [thread:$0]  %s278, 128, %s281, %s270
        $region44: #{tpu_custom_call.1} parent=39 // pred_fallthru
          _
      $region40: #{tpu_custom_call.1} parent=5 // pred_fallthru
        _
      %p284 = scmp.le.s32.totalorder 1, %s21
      %p285 = scmp.lt.s32.totalorder %s21, 3
      %p286 = pnand %p284, %p285
      %p287 = pneg %p286
      // Predicated region
      $region45: #{tpu_custom_call.1} parent=5 // pred_check
        _
      $region46: #{tpu_custom_call.1} parent=5 // pred_check_branch
        %289 = sbr.rel (%p286) target = $region48
      $region47: #{tpu_custom_call.1} parent=5 // pred_region
        %s290 = ssub.s32 %s21, 1
        %s291 = sand.u32 %s34, 1
        %s292 = scalar_lea.sflag [#allocation3], %s291
        %s293 = sand.u32 %s34, 1
        %s294 = smul.addr %s293, 8
        %s295 = scalar_lea.vmem [#allocation2], %s294
        // Predicated region
        $region49: #{tpu_custom_call.1} parent=47 // pred_check
          %p296 = pneg %p47
        $region50: #{tpu_custom_call.1} parent=47 // pred_check_branch
          %298 = sbr.rel (%p296) target = $region52
        $region51: #{tpu_custom_call.1} parent=47 // pred_region
          %299 = dma.done %s292, 128
        $region52: #{tpu_custom_call.1} parent=47 // pred_fallthru
          _
        // Predicated region
        $region53: #{tpu_custom_call.1} parent=47 // pred_check
          %p300 = pneg %p68
        $region54: #{tpu_custom_call.1} parent=47 // pred_check_branch
          %302 = sbr.rel (%p300) target = $region56
        $region55: #{tpu_custom_call.1} parent=47 // pred_region
          %303 = dma.done [#allocation6], 256
        $region56: #{tpu_custom_call.1} parent=47 // pred_fallthru
          _
        // Predicated region
        $region57: #{tpu_custom_call.1} parent=47 // pred_check
          %p304 = pneg %p110
        $region58: #{tpu_custom_call.1} parent=47 // pred_check_branch
          %306 = sbr.rel (%p304) target = $region60
        $region59: #{tpu_custom_call.1} parent=47 // pred_region
          %307 = dma.done [#allocation6], 512
        $region60: #{tpu_custom_call.1} parent=47 // pred_fallthru
          _
        // Predicated region
        $region61: #{tpu_custom_call.1} parent=47 // pred_check
          %p308 = pneg %p152
        $region62: #{tpu_custom_call.1} parent=47 // pred_check_branch
          %310 = sbr.rel (%p308) target = $region64
        $region63: #{tpu_custom_call.1} parent=47 // pred_region
          %311 = dma.done [#allocation9], 512
        $region64: #{tpu_custom_call.1} parent=47 // pred_fallthru
          _
        %s312 = sand.u32 %s34, 1
        %s313 = scalar_lea.sflag [#allocation3], %s312
        %s314 = sand.u32 %s34, 1
        %s315 = smul.addr %s314, 8
        %s316 = scalar_lea.vmem [#allocation2], %s315
        %p317 = pneg %p47
        %p318 = pneg %p44
        %p319 = pneg %p68
        %p320 = pneg %p65
        %p321 = pneg %p89
        %p322 = pneg %p86
        %p323 = pneg %p110
        %p324 = pneg %p107
        %p325 = pneg %p131
        %p326 = pneg %p128
        %p327 = pneg %p152
        %p328 = pneg %p149
        %p329 = pneg %p173
        %p330 = pneg %p170
        %p331 = pneg %p199
        %p332 = pneg %p196
        %s333 = sand.u32 %s186, 1
        %s334 = scalar_lea.sflag [#allocation4], %s333
        %s335 = sand.u32 %s186, 1
        %s336 = smul.addr %s335, 8
        %s337 = scalar_lea.vmem [#allocation10], %s336
        %v338 = vld [vmem:[%s295] sm:$0xff]
        %v339 = vld [vmem:[#allocation5] sm:$0xff]
        %v340 = vld [vmem:[#allocation5 + $0x8] sm:$0xff]
        %v341 = vld [vmem:[%s2] sm:$0x1]
        %v343 = vlaneseq
        %v344 = vshrl.u32 %v343, 7
        %v345 = vsub.s32 0, %v344
        %v346 = vrot.slane %v341, %v345
        %vm348 = vcmask 130048
        %v350 = vsel %vm348, %v338, 0
        %352 = vmatprep.subr.mxu0 0.0
        %353 = vmatpush1.msra.mxu0 %v339
        %354 = vmatprep.subr.mxu0 0.0
        %355 = vmatpush1.msra.mxu0 %v340
        %356 = vmatprep.subr.mxu0 0.0
        %357 = vmatpush1.msra.mxu0 0.0
        %358 = vmatprep.subr.mxu0 0.0
        %359 = vmatpush1.msra.mxu0 0.0
        %360 = vmatprep.subr.mxu0 0.0
        %361 = vmatpush1.msra.mxu0 0.0
        %362 = vmatprep.subr.mxu0 0.0
        %363 = vmatpush1.msra.mxu0 0.0
        %364 = vmatprep.subr.mxu0 0.0
        %365 = vmatpush1.msra.mxu0 0.0
        %366 = vmatprep.subr.mxu0 0.0
        %367 = vmatpush1.msra.mxu0 0.0
        %368 = vmatprep.subr.mxu0 0.0
        %369 = vmatpush1.msra.mxu0 0.0
        %370 = vmatprep.subr.mxu0 0.0
        %371 = vmatpush1.msra.mxu0 0.0
        %372 = vmatprep.subr.mxu0 0.0
        %373 = vmatpush1.msra.mxu0 0.0
        %374 = vmatprep.subr.mxu0 0.0
        %375 = vmatpush1.msra.mxu0 0.0
        %376 = vmatprep.subr.mxu0 0.0
        %377 = vmatpush1.msra.mxu0 0.0
        %378 = vmatprep.subr.mxu0 0.0
        %379 = vmatpush1.msra.mxu0 0.0
        %380 = vmatprep.subr.mxu0 0.0
        %381 = vmatpush1.msra.mxu0 0.0
        %382 = vmatprep.subr.mxu0 0.0
        %383 = vmatpush1.msra.mxu0 0.0
        %384 = vmatprep.subr.mxu0 0.0
        %385 = vmatpush1.msra.mxu0 0.0
        %386 = vmatprep.subr.mxu0 0.0
        %387 = vmatpush1.msra.mxu0 0.0
        %388 = vmatprep.subr.mxu0 0.0
        %389 = vmatpush1.msra.mxu0 0.0
        %390 = vmatprep.subr.mxu0 0.0
        %391 = vmatpush1.msra.mxu0 0.0
        %392 = vmatprep.subr.mxu0 0.0
        %393 = vmatpush1.msra.mxu0 0.0
        %394 = vmatprep.subr.mxu0 0.0
        %395 = vmatpush1.msra.mxu0 0.0
        %396 = vmatprep.subr.mxu0 0.0
        %397 = vmatpush1.msra.mxu0 0.0
        %398 = vmatprep.subr.mxu0 0.0
        %399 = vmatpush1.msra.mxu0 0.0
        %400 = vmatprep.subr.mxu0 0.0
        %401 = vmatpush1.msra.mxu0 0.0
        %402 = vmatprep.subr.mxu0 0.0
        %403 = vmatpush1.msra.mxu0 0.0
        %404 = vmatprep.subr.mxu0 0.0
        %405 = vmatpush1.msra.mxu0 0.0
        %406 = vmatprep.subr.mxu0 0.0
        %407 = vmatpush1.msra.mxu0 0.0
        %408 = vmatprep.subr.mxu0 0.0
        %409 = vmatpush1.msra.mxu0 0.0
        %410 = vmatprep.subr.mxu0 0.0
        %411 = vmatpush1.msra.mxu0 0.0
        %412 = vmatprep.subr.mxu0 0.0
        %413 = vmatpush1.msra.mxu0 0.0
        %414 = vmatprep.subr.mxu0 0.0
        %415 = vmatpush1.msra.mxu0 0.0
        %416 = vmatprep.mubr.f32.mxu0 0.0
        %417 = vmatmul.mubr.f32.gmra.mrb[0].mxu0 %v350
        %v418 = vpop.f32.mrb[0].mxu0
        %v419 = vadd.f32 %v346, %v418
        %v420 = vpop.f32.mrb[0].mxu0
        %421 = vdwg.mxu0
        %v422 = vmul.f32 %v419, 0.5
        %v423 = vmul.f32 %v419, 0.70710677
        %v424 = verf.f32.pop %v423
        %v425 = vadd.f32 %v424, 1.0
        %v426 = vmul.f32 %v422, %v425
        %v427 = vld [vmem:[#allocation7] sm:$0xff]
        %v428 = vld [vmem:[#allocation7 + $0x8] sm:$0xff]
        %v429 = vld [vmem:[#allocation7 + $0x10] sm:$0xff]
        %v430 = vld [vmem:[#allocation7 + $0x18] sm:$0xff]
        %v431 = vld [vmem:[%s4] sm:$0x1]
        %v433 = vlaneseq
        %v434 = vshrl.u32 %v433, 7
        %v435 = vsub.s32 0, %v434
        %v436 = vrot.slane %v431, %v435
        %vm438 = vcmask 261120
        %v440 = vsel %vm438, %v426, 0
        %442 = vmatprep.subr.mxu0 0.0
        %443 = vmatpush1.msra.mxu0 %v427
        %444 = vmatprep.subr.mxu0 0.0
        %445 = vmatpush1.msra.mxu0 %v428
        %446 = vmatprep.subr.mxu0 0.0
        %447 = vmatpush1.msra.mxu0 %v429
        %448 = vmatprep.subr.mxu0 0.0
        %449 = vmatpush1.msra.mxu0 %v430
        %450 = vmatprep.subr.mxu0 0.0
        %451 = vmatpush1.msra.mxu0 0.0
        %452 = vmatprep.subr.mxu0 0.0
        %453 = vmatpush1.msra.mxu0 0.0
        %454 = vmatprep.subr.mxu0 0.0
        %455 = vmatpush1.msra.mxu0 0.0
        %456 = vmatprep.subr.mxu0 0.0
        %457 = vmatpush1.msra.mxu0 0.0
        %458 = vmatprep.subr.mxu0 0.0
        %459 = vmatpush1.msra.mxu0 0.0
        %460 = vmatprep.subr.mxu0 0.0
        %461 = vmatpush1.msra.mxu0 0.0
        %462 = vmatprep.subr.mxu0 0.0
        %463 = vmatpush1.msra.mxu0 0.0
        %464 = vmatprep.subr.mxu0 0.0
        %465 = vmatpush1.msra.mxu0 0.0
        %466 = vmatprep.subr.mxu0 0.0
        %467 = vmatpush1.msra.mxu0 0.0
        %468 = vmatprep.subr.mxu0 0.0
        %469 = vmatpush1.msra.mxu0 0.0
        %470 = vmatprep.subr.mxu0 0.0
        %471 = vmatpush1.msra.mxu0 0.0
        %472 = vmatprep.subr.mxu0 0.0
        %473 = vmatpush1.msra.mxu0 0.0
        %474 = vmatprep.subr.mxu0 0.0
        %475 = vmatpush1.msra.mxu0 0.0
        %476 = vmatprep.subr.mxu0 0.0
        %477 = vmatpush1.msra.mxu0 0.0
        %478 = vmatprep.subr.mxu0 0.0
        %479 = vmatpush1.msra.mxu0 0.0
        %480 = vmatprep.subr.mxu0 0.0
        %481 = vmatpush1.msra.mxu0 0.0
        %482 = vmatprep.subr.mxu0 0.0
        %483 = vmatpush1.msra.mxu0 0.0
        %484 = vmatprep.subr.mxu0 0.0
        %485 = vmatpush1.msra.mxu0 0.0
        %486 = vmatprep.subr.mxu0 0.0
        %487 = vmatpush1.msra.mxu0 0.0
        %488 = vmatprep.subr.mxu0 0.0
        %489 = vmatpush1.msra.mxu0 0.0
        %490 = vmatprep.subr.mxu0 0.0
        %491 = vmatpush1.msra.mxu0 0.0
        %492 = vmatprep.subr.mxu0 0.0
        %493 = vmatpush1.msra.mxu0 0.0
        %494 = vmatprep.subr.mxu0 0.0
        %495 = vmatpush1.msra.mxu0 0.0
        %496 = vmatprep.subr.mxu0 0.0
        %497 = vmatpush1.msra.mxu0 0.0
        %498 = vmatprep.subr.mxu0 0.0
        %499 = vmatpush1.msra.mxu0 0.0
        %500 = vmatprep.subr.mxu0 0.0
        %501 = vmatpush1.msra.mxu0 0.0
        %502 = vmatprep.subr.mxu0 0.0
        %503 = vmatpush1.msra.mxu0 0.0
        %504 = vmatprep.subr.mxu0 0.0
        %505 = vmatpush1.msra.mxu0 0.0
        %506 = vmatprep.mubr.f32.mxu0 0.0
        %507 = vmatmul.mubr.f32.gmra.mrb[0].mxu0 %v440
        %v508 = vpop.f32.mrb[0].mxu0
        %v509 = vadd.f32 %v436, %v508
        %v510 = vpop.f32.mrb[0].mxu0
        %511 = vdwg.mxu0
        %v512 = vmul.f32 %v509, 0.5
        %v513 = vmul.f32 %v509, 0.70710677
        %v514 = verf.f32.pop %v513
        %v515 = vadd.f32 %v514, 1.0
        %v516 = vmul.f32 %v512, %v515
        %v517 = vld [vmem:[#allocation8] sm:$0xff]
        %v518 = vld [vmem:[#allocation8 + $0x8] sm:$0xff]
        %v519 = vld [vmem:[#allocation8 + $0x10] sm:$0xff]
        %v520 = vld [vmem:[#allocation8 + $0x18] sm:$0xff]
        %v521 = vld [vmem:[%s6] sm:$0x1]
        %v523 = vlaneseq
        %v524 = vshrl.u32 %v523, 7
        %v525 = vsub.s32 0, %v524
        %v526 = vrot.slane %v521, %v525
        %v529 = vsel %vm438, %v516, 0
        %531 = vmatprep.subr.mxu0 0.0
        %532 = vmatpush1.msra.mxu0 %v517
        %533 = vmatprep.subr.mxu0 0.0
        %534 = vmatpush1.msra.mxu0 %v518
        %535 = vmatprep.subr.mxu0 0.0
        %536 = vmatpush1.msra.mxu0 %v519
        %537 = vmatprep.subr.mxu0 0.0
        %538 = vmatpush1.msra.mxu0 %v520
        %539 = vmatprep.subr.mxu0 0.0
        %540 = vmatpush1.msra.mxu0 0.0
        %541 = vmatprep.subr.mxu0 0.0
        %542 = vmatpush1.msra.mxu0 0.0
        %543 = vmatprep.subr.mxu0 0.0
        %544 = vmatpush1.msra.mxu0 0.0
        %545 = vmatprep.subr.mxu0 0.0
        %546 = vmatpush1.msra.mxu0 0.0
        %547 = vmatprep.subr.mxu0 0.0
        %548 = vmatpush1.msra.mxu0 0.0
        %549 = vmatprep.subr.mxu0 0.0
        %550 = vmatpush1.msra.mxu0 0.0
        %551 = vmatprep.subr.mxu0 0.0
        %552 = vmatpush1.msra.mxu0 0.0
        %553 = vmatprep.subr.mxu0 0.0
        %554 = vmatpush1.msra.mxu0 0.0
        %555 = vmatprep.subr.mxu0 0.0
        %556 = vmatpush1.msra.mxu0 0.0
        %557 = vmatprep.subr.mxu0 0.0
        %558 = vmatpush1.msra.mxu0 0.0
        %559 = vmatprep.subr.mxu0 0.0
        %560 = vmatpush1.msra.mxu0 0.0
        %561 = vmatprep.subr.mxu0 0.0
        %562 = vmatpush1.msra.mxu0 0.0
        %563 = vmatprep.subr.mxu0 0.0
        %564 = vmatpush1.msra.mxu0 0.0
        %565 = vmatprep.subr.mxu0 0.0
        %566 = vmatpush1.msra.mxu0 0.0
        %567 = vmatprep.subr.mxu0 0.0
        %568 = vmatpush1.msra.mxu0 0.0
        %569 = vmatprep.subr.mxu0 0.0
        %570 = vmatpush1.msra.mxu0 0.0
        %571 = vmatprep.subr.mxu0 0.0
        %572 = vmatpush1.msra.mxu0 0.0
        %573 = vmatprep.subr.mxu0 0.0
        %574 = vmatpush1.msra.mxu0 0.0
        %575 = vmatprep.subr.mxu0 0.0
        %576 = vmatpush1.msra.mxu0 0.0
        %577 = vmatprep.subr.mxu0 0.0
        %578 = vmatpush1.msra.mxu0 0.0
        %579 = vmatprep.subr.mxu0 0.0
        %580 = vmatpush1.msra.mxu0 0.0
        %581 = vmatprep.subr.mxu0 0.0
        %582 = vmatpush1.msra.mxu0 0.0
        %583 = vmatprep.subr.mxu0 0.0
        %584 = vmatpush1.msra.mxu0 0.0
        %585 = vmatprep.subr.mxu0 0.0
        %586 = vmatpush1.msra.mxu0 0.0
        %587 = vmatprep.subr.mxu0 0.0
        %588 = vmatpush1.msra.mxu0 0.0
        %589 = vmatprep.subr.mxu0 0.0
        %590 = vmatpush1.msra.mxu0 0.0
        %591 = vmatprep.subr.mxu0 0.0
        %592 = vmatpush1.msra.mxu0 0.0
        %593 = vmatprep.subr.mxu0 0.0
        %594 = vmatpush1.msra.mxu0 0.0
        %595 = vmatprep.mubr.f32.mxu0 0.0
        %596 = vmatmul.mubr.f32.gmra.mrb[0].mxu0 %v529
        %v597 = vpop.f32.mrb[0].mxu0
        %v598 = vadd.f32 %v526, %v597
        %v599 = vpop.f32.mrb[0].mxu0
        %600 = vdwg.mxu0
        %601 = vst [vmem:[%s337] sm:$0xff] %v598
        %s602 = sand.u32 %s186, 1
        %s603 = scalar_lea.sflag [#allocation4], %s602
        %s604 = sand.u32 %s186, 1
        %s605 = smul.addr %s604, 8
        %s606 = scalar_lea.vmem [#allocation10], %s605
        // Predicated region
        $region65: #{tpu_custom_call.1} parent=47 // pred_check
          %p607 = pneg %p196
        $region66: #{tpu_custom_call.1} parent=47 // pred_check_branch
          %609 = sbr.rel (%p607) target = $region68
        $region67: #{tpu_custom_call.1} parent=47 // pred_region
          %s611 = ssub.s32 128, 128
          %612 = vsyncadd %s603, %s611
          %s613 = smul.addr %s26, 128
          %s614 = scalar_lea.hbm %s7, %s613
          %s616 = sshll.u32 %s606, 4
          %s617 = int_to_ptr.vmem [resolvable:$true] %s616
          %619 = dma.vmem_to_hbm [thread:$0]  %s617, 128, %s614, %s603
        $region68: #{tpu_custom_call.1} parent=47 // pred_fallthru
          _
      $region48: #{tpu_custom_call.1} parent=5 // pred_fallthru
        _
      %p620 = scmp.le.s32.totalorder 2, %s21
      // Predicated region
      $region69: #{tpu_custom_call.1} parent=5 // pred_check
        %p621 = pneg %p620
      $region70: #{tpu_custom_call.1} parent=5 // pred_check_branch
        %623 = sbr.rel (%p621) target = $region72
      $region71: #{tpu_custom_call.1} parent=5 // pred_region
        %s624 = ssub.s32 %s21, 2
        // Predicated region
        $region73: #{tpu_custom_call.1} parent=71 // pred_check
          %p625 = pneg %p202
        $region74: #{tpu_custom_call.1} parent=71 // pred_check_branch
          %627 = sbr.rel (%p625) target = $region76
        $region75: #{tpu_custom_call.1} parent=71 // pred_region
          %s628 = sand.u32 %s187, 1
          %s629 = scalar_lea.sflag [#allocation4], %s628
          %s630 = sand.u32 %s187, 1
          %s631 = smul.addr %s630, 8
          %s632 = scalar_lea.vmem [#allocation10], %s631
          %633 = dma.done %s629, 128
        $region76: #{tpu_custom_call.1} parent=71 // pred_fallthru
          _
      $region72: #{tpu_custom_call.1} parent=5 // pred_fallthru
        _
    $region6: #{tpu_custom_call.1} parent=1 // loop_footer
      %s25 = sadd.s32 1, %s21
    $region7: #{tpu_custom_call.1} parent=1 // loop_footer_branch
      %20 = sbr.rel target = $region3
    $region8: #{tpu_custom_call.1} parent=1 // loop_exit
      _
    %634 = vsyncpa [#allocation3], 1
    %s635 = scalar_lea.sflag [#allocation3], 1
    %636 = vsyncpa %s635, 1
    %637 = vsyncpa [#allocation6], 1
    %638 = vsyncpa [#allocation9], 1
    %639 = vsyncpa [#allocation4], 1
    %s640 = scalar_lea.sflag [#allocation4], 1
    %641 = vsyncpa %s640, 1

</llo_original>
